<compile_context>
chip_gen: v6e
topology: v6e:2x2x1
jax: 0.10.0
libtpu: 0.0.40
codegen_flags: <defaults>
</compile_context>

<pallas_src>
import functools

import jax
import jax.numpy as jnp
from jax.experimental import pallas as pl
from jax.experimental.pallas import tpu as pltpu


def _fused_conv_bn_prelu_kernel(x_ref, w_ref, b_ref, a_ref, o_ref, *, K, p):
    """Fused circular-pad + KxK conv (stride 1) + folded BN + PReLU.

    x_ref: (NB, H, W, Ci)   channels-last input block
    w_ref: (Co, P)          P = K*K*Ci, BN scale folded in, P order = (kh, kw, ci)
    b_ref: (Co, 1)          folded BN shift
    a_ref: (Co, 1)          per-channel PReLU slope
    o_ref: (NB, Co, Ho*Wo)  lane-dense output block (NCHW with H*W flattened)
    """
    x = x_ref[...]
    NB, H, W, Ci = x.shape

    # Circular ("wrap") padding, fused in VMEM — never materialized to HBM.
    if p > 0:
        x = jnp.concatenate([x[:, :, W - p:, :], x, x[:, :, :p, :]], axis=2)
        x = jnp.concatenate([x[:, H - p:, :, :], x, x[:, :p, :, :]], axis=1)
    Hp, Wp = H + 2 * p, W + 2 * p
    Ho, Wo = Hp - K + 1, Wp - K + 1

    # im2col: (NB, Ho, Wo, K*K*Ci) — conv taps / channels land on the lane axis.
    slabs = [x[:, kh:kh + Ho, kw:kw + Wo, :]
             for kh in range(K) for kw in range(K)]
    patches = slabs[0] if len(slabs) == 1 else jnp.concatenate(slabs, axis=3)

    # Flatten (Ho, Wo) -> Ho*Wo with a sublane concatenation (layout friendly;
    # avoids a lane-fold reshape).  For very large H, tile rows via the grid
    # instead so this stays modest.
    rows = [patches[:, i] for i in range(Ho)]            # each (NB, Wo, P)
    patches = rows[0] if len(rows) == 1 else jnp.concatenate(rows, axis=1)
    # patches: (NB, Ho*Wo, P)

    w = w_ref[...]          # (Co, P)
    b = b_ref[...]          # (Co, 1)
    a = a_ref[...]          # (Co, 1)

    dn = (((1,), (1,)), ((), ()))     # contract P with P (A @ B^T), no batch
    for n in range(NB):
        # (Co, P) x (Ho*Wo, P)^T -> (Co, Ho*Wo) on the MXU, fp32 accumulation.
        z = jax.lax.dot_general(w, patches[n], dn,
                                preferred_element_type=jnp.float32)
        z = z + b                               # folded BatchNorm shift
        z = jnp.where(z >= 0.0, z, a * z)       # PReLU (per-out-channel slope)
        o_ref[n] = z.astype(o_ref.dtype)


def conv_bn_prelu(x, conv_w, bn_gamma, bn_beta, bn_mean, bn_var, prelu_alpha,
                  *, stride=1, eps=1e-3, interpret=False):
    """NCHW forward of ConvBNPReLU (inference-mode BN), fused in one Pallas call."""
    N, Ci, H, W = x.shape
    Co, Ci_w, K, K2 = conv_w.shape
    assert Ci_w == Ci and K == K2
    p = (K - 1) // 2                       # matches torch: int((kSize - 1) / 2)
    assert p <= min(H, W), "circular padding must not exceed input dims"

    Hp, Wp = H + 2 * p, W + 2 * p
    Ho, Wo = Hp - K + 1, Wp - K + 1        # stride-1 output (== H, W for odd K)
    S = Ho * Wo
    P = K * K * Ci

    # ---- Fold inference-mode BatchNorm into the conv weight + a bias --------
    f32 = jnp.float32
    scale = (bn_gamma.astype(f32) / jnp.sqrt(bn_var.astype(f32) + eps))   # (Co,)
    w_f = conv_w.astype(f32) * scale[:, None, None, None]                 # (Co,Ci,K,K)
    bias = bn_beta.astype(f32) - bn_mean.astype(f32) * scale              # (Co,)

    # Flat weight (Co, K*K*Ci) in (kh, kw, ci) order == in-kernel patch order.
    wmat = jnp.transpose(w_f, (0, 2, 3, 1)).reshape(Co, P)
    bias2 = bias.reshape(Co, 1)
    alpha2 = prelu_alpha.astype(f32).reshape(Co, 1)

    # Channels-last inside the kernel puts channels/taps on the lane axis so
    # the conv is one MXU matmul per image.  (Single cheap XLA transpose; a
    # production pipeline would keep activations NHWC end-to-end.)
    x_nhwc = jnp.transpose(x, (0, 2, 3, 1))                               # (N,H,W,Ci)

    # ---- Batch NB images per grid step against a conservative VMEM budget ---
    itemsize = x.dtype.itemsize
    per_img = (2 * H * W * Ci * itemsize        # double-buffered input block
               + 2 * Co * S * itemsize          # double-buffered output block
               + Ci * Hp * Wp * 4               # padded copy
               + 2 * S * P * 4)                 # im2col patches (+ flatten copy)
    NB = max(1, min(N, (6 << 20) // max(per_img, 1)))
    while N % NB:                               # keep the grid exact
        NB -= 1
    grid = (N // NB,)

    flops = 2 * N * Co * P * S
    bytes_accessed = int((x.size + wmat.size + 2 * Co) * itemsize
                         + N * Co * S * itemsize)

    out_flat = pl.pallas_call(
        functools.partial(_fused_conv_bn_prelu_kernel, K=K, p=p),
        out_shape=jax.ShapeDtypeStruct((N, Co, S), x.dtype),
        grid_spec=pltpu.PrefetchScalarGridSpec(
            num_scalar_prefetch=0,
            grid=grid,
            in_specs=[
                pl.BlockSpec((NB, H, W, Ci), lambda i: (i, 0, 0, 0)),
                pl.BlockSpec((Co, P), lambda i: (0, 0)),
                pl.BlockSpec((Co, 1), lambda i: (0, 0)),
                pl.BlockSpec((Co, 1), lambda i: (0, 0)),
            ],
            out_specs=pl.BlockSpec((NB, Co, S), lambda i: (i, 0, 0)),
        ),
        compiler_params=pltpu.CompilerParams(
            dimension_semantics=("parallel",),
            vmem_limit_bytes=32 * 1024 * 1024,
        ),
        cost_estimate=pl.CostEstimate(
            flops=flops, transcendentals=0, bytes_accessed=bytes_accessed),
        interpret=interpret,
    )(x_nhwc, wmat, bias2, alpha2)

    out = out_flat.reshape(N, Co, Ho, Wo)       # free reshape back to NCHW
    if stride > 1:
        # Stride-s conv output == stride-1 output subsampled every s pixels.
        out = out[:, :, ::stride, ::stride]
    return out


def conv_bn_prelu_reference(x, conv_w, gamma, beta, mean, var, alpha,
                            *, stride=1, eps=1e-3):
    """Pure-JAX reference: wrap pad -> conv2d -> BN (inference) -> PReLU."""
    K = conv_w.shape[-1]
    p = (K - 1) // 2
    xp = jnp.pad(x, ((0, 0), (0, 0), (p, p), (p, p)), mode="wrap") if p else x
    y = jax.lax.conv_general_dilated(
        xp, conv_w, window_strides=(stride, stride), padding="VALID",
        dimension_numbers=("NCHW", "OIHW", "NCHW"),
        precision=jax.lax.Precision.HIGHEST)
    scale = gamma / jnp.sqrt(var + eps)
    y = y * scale[None, :, None, None] + (beta - mean * scale)[None, :, None, None]
    return jnp.where(y >= 0, y, alpha[None, :, None, None] * y)


if __name__ == "__main__":
    key = jax.random.PRNGKey(0)
    k_x, k_w, k_g, k_b, k_m, k_v, k_a = jax.random.split(key, 7)

    N, Ci, Co, H, W, K = 2, 4, 8, 16, 16, 3   # ConvBNPReLU(nIn=4, nOut=8, kSize=3)
    x = jax.random.normal(k_x, (N, Ci, H, W), dtype=jnp.float32)
    conv_w = 0.1 * jax.random.normal(k_w, (Co, Ci, K, K), dtype=jnp.float32)
    gamma = 1.0 + 0.1 * jax.random.normal(k_g, (Co,), dtype=jnp.float32)
    beta = 0.1 * jax.random.normal(k_b, (Co,), dtype=jnp.float32)
    mean = 0.1 * jax.random.normal(k_m, (Co,), dtype=jnp.float32)
    var = jax.random.uniform(k_v, (Co,), dtype=jnp.float32,
                             minval=0.5, maxval=1.5)
    alpha = 0.25 + 0.1 * jax.random.normal(k_a, (Co,), dtype=jnp.float32)

    out = conv_bn_prelu(x, conv_w, gamma, beta, mean, var, alpha, stride=1)
    out = jax.block_until_ready(out)

    ref = conv_bn_prelu_reference(x, conv_w, gamma, beta, mean, var, alpha,
                                  stride=1)
    assert out.shape == ref.shape == (N, Co, H, W), out.shape
    assert jnp.allclose(out, ref, atol=1e-3, rtol=1e-3), (
        "max abs err = %g" % float(jnp.max(jnp.abs(out - ref))))

    print("KERNEL_OK")
</pallas_src>

<mosaic_0001>
module attributes {stable_mosaic.version = 11 : i64} {
  func.func @_fused_conv_bn_prelu_kernel(%arg0: i32, %arg1: memref<2x16x16x4xf32, #tpu.memory_space<vmem>>, %arg2: memref<8x36xf32, #tpu.memory_space<vmem>>, %arg3: memref<8x1xf32, #tpu.memory_space<vmem>>, %arg4: memref<8x1xf32, #tpu.memory_space<vmem>>, %arg5: memref<2x8x256xf32, #tpu.memory_space<vmem>>) attributes {dimension_semantics = [#tpu.dimension_semantics<parallel>], iteration_bounds = array<i64: 1>, scalar_prefetch = 0 : i64, scratch_operands = 0 : i64, tpu.core_type = #tpu.core_type<tc>, window_params = [{transform_indices = @transform_0, window_bounds = array<i64: 2, 16, 16, 4>}, {pipeline_mode = #tpu.pipeline_mode<synchronous>, transform_indices = @transform_1, window_bounds = array<i64: 8, 36>}, {pipeline_mode = #tpu.pipeline_mode<synchronous>, transform_indices = @transform_2, window_bounds = array<i64: 8, 1>}, {pipeline_mode = #tpu.pipeline_mode<synchronous>, transform_indices = @transform_3, window_bounds = array<i64: 8, 1>}, {transform_indices = @transform_4, window_bounds = array<i64: 2, 8, 256>}]} {
    %c0 = arith.constant 0 : index
    %c0_0 = arith.constant 0 : index
    %c0_1 = arith.constant 0 : index
    %c0_2 = arith.constant 0 : index
    %0 = vector.load %arg1[%c0, %c0_0, %c0_1, %c0_2] : memref<2x16x16x4xf32, #tpu.memory_space<vmem>>, vector<2x16x16x4xf32>
    %1 = vector.extract_strided_slice %0 {offsets = [0, 0, 15, 0], sizes = [2, 16, 1, 4], strides = [1, 1, 1, 1]} : vector<2x16x16x4xf32> to vector<2x16x1x4xf32>
    %2 = vector.extract_strided_slice %0 {offsets = [0, 0, 0, 0], sizes = [2, 16, 1, 4], strides = [1, 1, 1, 1]} : vector<2x16x16x4xf32> to vector<2x16x1x4xf32>
    %3 = tpu.concatenate %1, %0, %2 in 2 : vector<2x16x1x4xf32>, vector<2x16x16x4xf32>, vector<2x16x1x4xf32> -> vector<2x16x18x4xf32>
    %4 = vector.extract_strided_slice %3 {offsets = [0, 15, 0, 0], sizes = [2, 1, 18, 4], strides = [1, 1, 1, 1]} : vector<2x16x18x4xf32> to vector<2x1x18x4xf32>
    %5 = vector.extract_strided_slice %3 {offsets = [0, 0, 0, 0], sizes = [2, 1, 18, 4], strides = [1, 1, 1, 1]} : vector<2x16x18x4xf32> to vector<2x1x18x4xf32>
    %6 = tpu.concatenate %4, %3, %5 in 1 : vector<2x1x18x4xf32>, vector<2x16x18x4xf32>, vector<2x1x18x4xf32> -> vector<2x18x18x4xf32>
    %7 = vector.extract_strided_slice %6 {offsets = [0, 0, 0, 0], sizes = [2, 16, 16, 4], strides = [1, 1, 1, 1]} : vector<2x18x18x4xf32> to vector<2x16x16x4xf32>
    %8 = vector.extract_strided_slice %6 {offsets = [0, 0, 1, 0], sizes = [2, 16, 16, 4], strides = [1, 1, 1, 1]} : vector<2x18x18x4xf32> to vector<2x16x16x4xf32>
    %9 = vector.extract_strided_slice %6 {offsets = [0, 0, 2, 0], sizes = [2, 16, 16, 4], strides = [1, 1, 1, 1]} : vector<2x18x18x4xf32> to vector<2x16x16x4xf32>
    %10 = vector.extract_strided_slice %6 {offsets = [0, 1, 0, 0], sizes = [2, 16, 16, 4], strides = [1, 1, 1, 1]} : vector<2x18x18x4xf32> to vector<2x16x16x4xf32>
    %11 = vector.extract_strided_slice %6 {offsets = [0, 1, 1, 0], sizes = [2, 16, 16, 4], strides = [1, 1, 1, 1]} : vector<2x18x18x4xf32> to vector<2x16x16x4xf32>
    %12 = vector.extract_strided_slice %6 {offsets = [0, 1, 2, 0], sizes = [2, 16, 16, 4], strides = [1, 1, 1, 1]} : vector<2x18x18x4xf32> to vector<2x16x16x4xf32>
    %13 = vector.extract_strided_slice %6 {offsets = [0, 2, 0, 0], sizes = [2, 16, 16, 4], strides = [1, 1, 1, 1]} : vector<2x18x18x4xf32> to vector<2x16x16x4xf32>
    %14 = vector.extract_strided_slice %6 {offsets = [0, 2, 1, 0], sizes = [2, 16, 16, 4], strides = [1, 1, 1, 1]} : vector<2x18x18x4xf32> to vector<2x16x16x4xf32>
    %15 = vector.extract_strided_slice %6 {offsets = [0, 2, 2, 0], sizes = [2, 16, 16, 4], strides = [1, 1, 1, 1]} : vector<2x18x18x4xf32> to vector<2x16x16x4xf32>
    %16 = tpu.concatenate %7, %8, %9, %10, %11, %12, %13, %14, %15 in 3 : vector<2x16x16x4xf32>, vector<2x16x16x4xf32>, vector<2x16x16x4xf32>, vector<2x16x16x4xf32>, vector<2x16x16x4xf32>, vector<2x16x16x4xf32>, vector<2x16x16x4xf32>, vector<2x16x16x4xf32>, vector<2x16x16x4xf32> -> vector<2x16x16x36xf32>
    %17 = vector.extract_strided_slice %16 {offsets = [0, 0, 0, 0], sizes = [2, 1, 16, 36], strides = [1, 1, 1, 1]} : vector<2x16x16x36xf32> to vector<2x1x16x36xf32>
    %18 = vector.shape_cast %17 : vector<2x1x16x36xf32> to vector<2x16x36xf32>
    %19 = vector.extract_strided_slice %16 {offsets = [0, 1, 0, 0], sizes = [2, 1, 16, 36], strides = [1, 1, 1, 1]} : vector<2x16x16x36xf32> to vector<2x1x16x36xf32>
    %20 = vector.shape_cast %19 : vector<2x1x16x36xf32> to vector<2x16x36xf32>
    %21 = vector.extract_strided_slice %16 {offsets = [0, 2, 0, 0], sizes = [2, 1, 16, 36], strides = [1, 1, 1, 1]} : vector<2x16x16x36xf32> to vector<2x1x16x36xf32>
    %22 = vector.shape_cast %21 : vector<2x1x16x36xf32> to vector<2x16x36xf32>
    %23 = vector.extract_strided_slice %16 {offsets = [0, 3, 0, 0], sizes = [2, 1, 16, 36], strides = [1, 1, 1, 1]} : vector<2x16x16x36xf32> to vector<2x1x16x36xf32>
    %24 = vector.shape_cast %23 : vector<2x1x16x36xf32> to vector<2x16x36xf32>
    %25 = vector.extract_strided_slice %16 {offsets = [0, 4, 0, 0], sizes = [2, 1, 16, 36], strides = [1, 1, 1, 1]} : vector<2x16x16x36xf32> to vector<2x1x16x36xf32>
    %26 = vector.shape_cast %25 : vector<2x1x16x36xf32> to vector<2x16x36xf32>
    %27 = vector.extract_strided_slice %16 {offsets = [0, 5, 0, 0], sizes = [2, 1, 16, 36], strides = [1, 1, 1, 1]} : vector<2x16x16x36xf32> to vector<2x1x16x36xf32>
    %28 = vector.shape_cast %27 : vector<2x1x16x36xf32> to vector<2x16x36xf32>
    %29 = vector.extract_strided_slice %16 {offsets = [0, 6, 0, 0], sizes = [2, 1, 16, 36], strides = [1, 1, 1, 1]} : vector<2x16x16x36xf32> to vector<2x1x16x36xf32>
    %30 = vector.shape_cast %29 : vector<2x1x16x36xf32> to vector<2x16x36xf32>
    %31 = vector.extract_strided_slice %16 {offsets = [0, 7, 0, 0], sizes = [2, 1, 16, 36], strides = [1, 1, 1, 1]} : vector<2x16x16x36xf32> to vector<2x1x16x36xf32>
    %32 = vector.shape_cast %31 : vector<2x1x16x36xf32> to vector<2x16x36xf32>
    %33 = vector.extract_strided_slice %16 {offsets = [0, 8, 0, 0], sizes = [2, 1, 16, 36], strides = [1, 1, 1, 1]} : vector<2x16x16x36xf32> to vector<2x1x16x36xf32>
    %34 = vector.shape_cast %33 : vector<2x1x16x36xf32> to vector<2x16x36xf32>
    %35 = vector.extract_strided_slice %16 {offsets = [0, 9, 0, 0], sizes = [2, 1, 16, 36], strides = [1, 1, 1, 1]} : vector<2x16x16x36xf32> to vector<2x1x16x36xf32>
    %36 = vector.shape_cast %35 : vector<2x1x16x36xf32> to vector<2x16x36xf32>
    %37 = vector.extract_strided_slice %16 {offsets = [0, 10, 0, 0], sizes = [2, 1, 16, 36], strides = [1, 1, 1, 1]} : vector<2x16x16x36xf32> to vector<2x1x16x36xf32>
    %38 = vector.shape_cast %37 : vector<2x1x16x36xf32> to vector<2x16x36xf32>
    %39 = vector.extract_strided_slice %16 {offsets = [0, 11, 0, 0], sizes = [2, 1, 16, 36], strides = [1, 1, 1, 1]} : vector<2x16x16x36xf32> to vector<2x1x16x36xf32>
    %40 = vector.shape_cast %39 : vector<2x1x16x36xf32> to vector<2x16x36xf32>
    %41 = vector.extract_strided_slice %16 {offsets = [0, 12, 0, 0], sizes = [2, 1, 16, 36], strides = [1, 1, 1, 1]} : vector<2x16x16x36xf32> to vector<2x1x16x36xf32>
    %42 = vector.shape_cast %41 : vector<2x1x16x36xf32> to vector<2x16x36xf32>
    %43 = vector.extract_strided_slice %16 {offsets = [0, 13, 0, 0], sizes = [2, 1, 16, 36], strides = [1, 1, 1, 1]} : vector<2x16x16x36xf32> to vector<2x1x16x36xf32>
    %44 = vector.shape_cast %43 : vector<2x1x16x36xf32> to vector<2x16x36xf32>
    %45 = vector.extract_strided_slice %16 {offsets = [0, 14, 0, 0], sizes = [2, 1, 16, 36], strides = [1, 1, 1, 1]} : vector<2x16x16x36xf32> to vector<2x1x16x36xf32>
    %46 = vector.shape_cast %45 : vector<2x1x16x36xf32> to vector<2x16x36xf32>
    %47 = vector.extract_strided_slice %16 {offsets = [0, 15, 0, 0], sizes = [2, 1, 16, 36], strides = [1, 1, 1, 1]} : vector<2x16x16x36xf32> to vector<2x1x16x36xf32>
    %48 = vector.shape_cast %47 : vector<2x1x16x36xf32> to vector<2x16x36xf32>
    %49 = tpu.concatenate %18, %20, %22, %24, %26, %28, %30, %32, %34, %36, %38, %40, %42, %44, %46, %48 in 1 : vector<2x16x36xf32>, vector<2x16x36xf32>, vector<2x16x36xf32>, vector<2x16x36xf32>, vector<2x16x36xf32>, vector<2x16x36xf32>, vector<2x16x36xf32>, vector<2x16x36xf32>, vector<2x16x36xf32>, vector<2x16x36xf32>, vector<2x16x36xf32>, vector<2x16x36xf32>, vector<2x16x36xf32>, vector<2x16x36xf32>, vector<2x16x36xf32>, vector<2x16x36xf32> -> vector<2x256x36xf32>
    %c0_3 = arith.constant 0 : index
    %c0_4 = arith.constant 0 : index
    %50 = vector.load %arg2[%c0_3, %c0_4] : memref<8x36xf32, #tpu.memory_space<vmem>>, vector<8x36xf32>
    %c0_5 = arith.constant 0 : index
    %c0_6 = arith.constant 0 : index
    %51 = vector.load %arg3[%c0_5, %c0_6] : memref<8x1xf32, #tpu.memory_space<vmem>>, vector<8x1xf32>
    %c0_7 = arith.constant 0 : index
    %c0_8 = arith.constant 0 : index
    %52 = vector.load %arg4[%c0_7, %c0_8] : memref<8x1xf32, #tpu.memory_space<vmem>>, vector<8x1xf32>
    %53 = vector.extract_strided_slice %49 {offsets = [0, 0, 0], sizes = [1, 256, 36], strides = [1, 1, 1]} : vector<2x256x36xf32> to vector<1x256x36xf32>
    %54 = vector.shape_cast %53 : vector<1x256x36xf32> to vector<256x36xf32>
    %cst = arith.constant dense<0.000000e+00> : vector<8x256xf32>
    %55 = tpu.matmul %50, %54, %cst {dimension_numbers = #tpu.dot_dimension_numbers<[1], [1], [0], [0], [0, 0, 1, 0], [], []>} : vector<8x36xf32>, vector<256x36xf32>, vector<8x256xf32> -> vector<8x256xf32>
    %56 = vector.broadcast %51 : vector<8x1xf32> to vector<8x256xf32>
    %57 = arith.addf %55, %56 : vector<8x256xf32>
    %cst_9 = arith.constant 0.000000e+00 : f32
    %58 = vector.broadcast %cst_9 : f32 to vector<8x256xf32>
    %59 = arith.cmpf oge, %57, %58 : vector<8x256xf32>
    %60 = vector.broadcast %52 : vector<8x1xf32> to vector<8x256xf32>
    %61 = arith.mulf %60, %57 : vector<8x256xf32>
    %62 = arith.select %59, %57, %61 : vector<8x256xi1>, vector<8x256xf32>
    %c0_10 = arith.constant 0 : index
    %c0_11 = arith.constant 0 : index
    %c0_12 = arith.constant 0 : index
    %63 = vector.load %arg5[%c0_10, %c0_11, %c0_12] : memref<2x8x256xf32, #tpu.memory_space<vmem>>, vector<1x8x256xf32>
    %64 = vector.shape_cast %63 : vector<1x8x256xf32> to vector<8x256xf32>
    %65 = vector.shape_cast %62 : vector<8x256xf32> to vector<1x8x256xf32>
    tpu.vector_store %arg5[%c0_10, %c0_11, %c0_12], %65 {strides = array<i32>} : memref<2x8x256xf32, #tpu.memory_space<vmem>>, vector<1x8x256xf32>,
    %66 = vector.extract_strided_slice %49 {offsets = [1, 0, 0], sizes = [1, 256, 36], strides = [1, 1, 1]} : vector<2x256x36xf32> to vector<1x256x36xf32>
    %67 = vector.shape_cast %66 : vector<1x256x36xf32> to vector<256x36xf32>
    %cst_13 = arith.constant dense<0.000000e+00> : vector<8x256xf32>
    %68 = tpu.matmul %50, %67, %cst_13 {dimension_numbers = #tpu.dot_dimension_numbers<[1], [1], [0], [0], [0, 0, 1, 0], [], []>} : vector<8x36xf32>, vector<256x36xf32>, vector<8x256xf32> -> vector<8x256xf32>
    %69 = vector.broadcast %51 : vector<8x1xf32> to vector<8x256xf32>
    %70 = arith.addf %68, %69 : vector<8x256xf32>
    %cst_14 = arith.constant 0.000000e+00 : f32
    %71 = vector.broadcast %cst_14 : f32 to vector<8x256xf32>
    %72 = arith.cmpf oge, %70, %71 : vector<8x256xf32>
    %73 = vector.broadcast %52 : vector<8x1xf32> to vector<8x256xf32>
    %74 = arith.mulf %73, %70 : vector<8x256xf32>
    %75 = arith.select %72, %70, %74 : vector<8x256xi1>, vector<8x256xf32>
    %c1 = arith.constant 1 : index
    %c0_15 = arith.constant 0 : index
    %c0_16 = arith.constant 0 : index
    %76 = vector.load %arg5[%c1, %c0_15, %c0_16] : memref<2x8x256xf32, #tpu.memory_space<vmem>>, vector<1x8x256xf32>
    %77 = vector.shape_cast %76 : vector<1x8x256xf32> to vector<8x256xf32>
    %78 = vector.shape_cast %75 : vector<8x256xf32> to vector<1x8x256xf32>
    tpu.vector_store %arg5[%c1, %c0_15, %c0_16], %78 {strides = array<i32>} : memref<2x8x256xf32, #tpu.memory_space<vmem>>, vector<1x8x256xf32>,
    return
  }
  func.func @transform_0(%arg0: i32) -> (i32, i32, i32, i32) {
    %c0_i32 = arith.constant 0 : i32
    %c0_i32_0 = arith.constant 0 : i32
    %c0_i32_1 = arith.constant 0 : i32
    %c0_i32_2 = arith.constant 0 : i32
    return %arg0, %c0_i32, %c0_i32_0, %c0_i32_1 : i32, i32, i32, i32
  }
  func.func @transform_1(%arg0: i32) -> (i32, i32) {
    %c0_i32 = arith.constant 0 : i32
    %c0_i32_0 = arith.constant 0 : i32
    %c0_i32_1 = arith.constant 0 : i32
    return %c0_i32, %c0_i32_0 : i32, i32
  }
  func.func @transform_2(%arg0: i32) -> (i32, i32) {
    %c0_i32 = arith.constant 0 : i32
    %c0_i32_0 = arith.constant 0 : i32
    %c0_i32_1 = arith.constant 0 : i32
    return %c0_i32, %c0_i32_0 : i32, i32
  }
  func.func @transform_3(%arg0: i32) -> (i32, i32) {
    %c0_i32 = arith.constant 0 : i32
    %c0_i32_0 = arith.constant 0 : i32
    %c0_i32_1 = arith.constant 0 : i32
    return %c0_i32, %c0_i32_0 : i32, i32
  }
  func.func @transform_4(%arg0: i32) -> (i32, i32, i32) {
    %c0_i32 = arith.constant 0 : i32
    %c0_i32_0 = arith.constant 0 : i32
    %c0_i32_1 = arith.constant 0 : i32
    return %arg0, %c0_i32, %c0_i32_0 : i32, i32, i32
  }
}

</mosaic_0001>

<llo_original>
// kernel: tpu_custom_call.1
$region0: #{tpu_custom_call.1}
  #allocation0 [shape = 'u32[]', space=smem, size = 0x4, offset = 0x4, fixed_abs, tag = 'smem constant byte address 0x4 - core index']
  #allocation1 [shape = 'u32[144,128]{1,0:T(1,128)}', space=vmem, size = 0x12000, scoped, tag = 'internal scratch']
  %s0 = inlined_call_operand.vmem [shape: f32[2,16,16,4], index: 0, kind: input, shape index: {}]
  %s1 = inlined_call_operand.vmem [shape: f32[8,36], index: 1, kind: input, shape index: {}]
  %s2 = inlined_call_operand.vmem [shape: f32[8,1], index: 2, kind: input, shape index: {}]
  %s3 = inlined_call_operand.vmem [shape: f32[8,1], index: 3, kind: input, shape index: {}]
  %s4 = inlined_call_operand.hbm [shape: f32[2,8,256], index: 4, kind: output, shape index: {}]
  %s5 = sld [smem:[#allocation0]]
  $region26: #{tpu_custom_call.1} parent=0
    _
  %s7 = ssub.s32 1, %s5
  %s8 = scalar_select 0, %s7, %s5
  $region1: #{tpu_custom_call.1} parent=0
    #allocation2 [shape = 'u8[16384]{0}', space=vmem, size = 0x4000, scoped, tag = 'output window, operand 0, single buffered']
    #allocation3 [shape = 's32[1]{0}', space=sflag, size = 0x4, scoped, tag = 'scoped memory for tpu_custom_call.1']
    %9 = vsyncpa [#allocation3], 0
    // Predicated region
    $region2: #{tpu_custom_call.1} parent=1 // pred_check
      _
    $region3: #{tpu_custom_call.1} parent=1 // pred_check_branch
      %11 = sbr.rel (0) target = $region5
    $region4: #{tpu_custom_call.1} parent=1 // pred_region
      _
    $region5: #{tpu_custom_call.1} parent=1 // pred_fallthru
      _
    // Predicated region
    $region6: #{tpu_custom_call.1} parent=1 // pred_check
      _
    $region7: #{tpu_custom_call.1} parent=1 // pred_check_branch
      %13 = sbr.rel (0) target = $region9
    $region8: #{tpu_custom_call.1} parent=1 // pred_region
      _
    $region9: #{tpu_custom_call.1} parent=1 // pred_fallthru
      _
    // Predicated region
    $region10: #{tpu_custom_call.1} parent=1 // pred_check
      _
    $region11: #{tpu_custom_call.1} parent=1 // pred_check_branch
      %15 = sbr.rel (0) target = $region13
    $region12: #{tpu_custom_call.1} parent=1 // pred_region
      _
    $region13: #{tpu_custom_call.1} parent=1 // pred_fallthru
      _
    // Predicated region
    $region14: #{tpu_custom_call.1} parent=1 // pred_check
      _
    $region15: #{tpu_custom_call.1} parent=1 // pred_check_branch
      %17 = sbr.rel (0) target = $region17
    $region16: #{tpu_custom_call.1} parent=1 // pred_region
      _
    $region17: #{tpu_custom_call.1} parent=1 // pred_fallthru
      _
    %v18 = vld [vmem:[%s0] sm:$0xff]
    %v19 = vld [vmem:[%s0 + $0x8] sm:$0xff]
    %v20 = vld [vmem:[%s0 + $0x10] sm:$0xff]
    %v21 = vld [vmem:[%s0 + $0x18] sm:$0xff]
    %v22 = vld [vmem:[%s0 + $0x20] sm:$0xff]
    %v23 = vld [vmem:[%s0 + $0x28] sm:$0xff]
    %v24 = vld [vmem:[%s0 + $0x30] sm:$0xff]
    %v25 = vld [vmem:[%s0 + $0x38] sm:$0xff]
    %v26 = vld [vmem:[%s0 + $0x40] sm:$0xff]
    %v27 = vld [vmem:[%s0 + $0x48] sm:$0xff]
    %v28 = vld [vmem:[%s0 + $0x50] sm:$0xff]
    %v29 = vld [vmem:[%s0 + $0x58] sm:$0xff]
    %v30 = vld [vmem:[%s0 + $0x60] sm:$0xff]
    %v31 = vld [vmem:[%s0 + $0x68] sm:$0xff]
    %v32 = vld [vmem:[%s0 + $0x70] sm:$0xff]
    %v33 = vld [vmem:[%s0 + $0x78] sm:$0xff]
    %v34 = vld [vmem:[%s0 + $0x80] sm:$0xff]
    %v35 = vld [vmem:[%s0 + $0x88] sm:$0xff]
    %v36 = vld [vmem:[%s0 + $0x90] sm:$0xff]
    %v37 = vld [vmem:[%s0 + $0x98] sm:$0xff]
    %v38 = vld [vmem:[%s0 + $0xa0] sm:$0xff]
    %v39 = vld [vmem:[%s0 + $0xa8] sm:$0xff]
    %v40 = vld [vmem:[%s0 + $0xb0] sm:$0xff]
    %v41 = vld [vmem:[%s0 + $0xb8] sm:$0xff]
    %v42 = vld [vmem:[%s0 + $0xc0] sm:$0xff]
    %v43 = vld [vmem:[%s0 + $0xc8] sm:$0xff]
    %v44 = vld [vmem:[%s0 + $0xd0] sm:$0xff]
    %v45 = vld [vmem:[%s0 + $0xd8] sm:$0xff]
    %v46 = vld [vmem:[%s0 + $0xe0] sm:$0xff]
    %v47 = vld [vmem:[%s0 + $0xe8] sm:$0xff]
    %v48 = vld [vmem:[%s0 + $0xf0] sm:$0xff]
    %v49 = vld [vmem:[%s0 + $0xf8] sm:$0xff]
    %v50 = vld [vmem:[%s0 + $0x100] sm:$0xff]
    %v51 = vld [vmem:[%s0 + $0x108] sm:$0xff]
    %v52 = vld [vmem:[%s0 + $0x110] sm:$0xff]
    %v53 = vld [vmem:[%s0 + $0x118] sm:$0xff]
    %v54 = vld [vmem:[%s0 + $0x120] sm:$0xff]
    %v55 = vld [vmem:[%s0 + $0x128] sm:$0xff]
    %v56 = vld [vmem:[%s0 + $0x130] sm:$0xff]
    %v57 = vld [vmem:[%s0 + $0x138] sm:$0xff]
    %v58 = vld [vmem:[%s0 + $0x140] sm:$0xff]
    %v59 = vld [vmem:[%s0 + $0x148] sm:$0xff]
    %v60 = vld [vmem:[%s0 + $0x150] sm:$0xff]
    %v61 = vld [vmem:[%s0 + $0x158] sm:$0xff]
    %v62 = vld [vmem:[%s0 + $0x160] sm:$0xff]
    %v63 = vld [vmem:[%s0 + $0x168] sm:$0xff]
    %v64 = vld [vmem:[%s0 + $0x170] sm:$0xff]
    %v65 = vld [vmem:[%s0 + $0x178] sm:$0xff]
    %v66 = vld [vmem:[%s0 + $0x180] sm:$0xff]
    %v67 = vld [vmem:[%s0 + $0x188] sm:$0xff]
    %v68 = vld [vmem:[%s0 + $0x190] sm:$0xff]
    %v69 = vld [vmem:[%s0 + $0x198] sm:$0xff]
    %v70 = vld [vmem:[%s0 + $0x1a0] sm:$0xff]
    %v71 = vld [vmem:[%s0 + $0x1a8] sm:$0xff]
    %v72 = vld [vmem:[%s0 + $0x1b0] sm:$0xff]
    %v73 = vld [vmem:[%s0 + $0x1b8] sm:$0xff]
    %v74 = vld [vmem:[%s0 + $0x1c0] sm:$0xff]
    %v75 = vld [vmem:[%s0 + $0x1c8] sm:$0xff]
    %v76 = vld [vmem:[%s0 + $0x1d0] sm:$0xff]
    %v77 = vld [vmem:[%s0 + $0x1d8] sm:$0xff]
    %v78 = vld [vmem:[%s0 + $0x1e0] sm:$0xff]
    %v79 = vld [vmem:[%s0 + $0x1e8] sm:$0xff]
    %v80 = vld [vmem:[%s0 + $0x1f0] sm:$0xff]
    %v81 = vld [vmem:[%s0 + $0x1f8] sm:$0xff]
    %v114 = vrot.slane %v19, 7
    %v115 = vrot.slane %v21, 7
    %v116 = vrot.slane %v23, 7
    %v117 = vrot.slane %v25, 7
    %v118 = vrot.slane %v27, 7
    %v119 = vrot.slane %v29, 7
    %v120 = vrot.slane %v31, 7
    %v121 = vrot.slane %v33, 7
    %v122 = vrot.slane %v35, 7
    %v123 = vrot.slane %v37, 7
    %v124 = vrot.slane %v39, 7
    %v125 = vrot.slane %v41, 7
    %v126 = vrot.slane %v43, 7
    %v127 = vrot.slane %v45, 7
    %v128 = vrot.slane %v47, 7
    %v129 = vrot.slane %v49, 7
    %v130 = vrot.slane %v51, 7
    %v131 = vrot.slane %v53, 7
    %v132 = vrot.slane %v55, 7
    %v133 = vrot.slane %v57, 7
    %v134 = vrot.slane %v59, 7
    %v135 = vrot.slane %v61, 7
    %v136 = vrot.slane %v63, 7
    %v137 = vrot.slane %v65, 7
    %v138 = vrot.slane %v67, 7
    %v139 = vrot.slane %v69, 7
    %v140 = vrot.slane %v71, 7
    %v141 = vrot.slane %v73, 7
    %v142 = vrot.slane %v75, 7
    %v143 = vrot.slane %v77, 7
    %v144 = vrot.slane %v79, 7
    %v145 = vrot.slane %v81, 7
    %vm210 = vcmask 1040384
    %v211 = vrot.slane %v18, 7
    %v212 = vsel %vm210, %v211, %v114
    %v213 = vrot.slane %v20, 7
    %v214 = vsel %vm210, %v213, %v115
    %v215 = vrot.slane %v22, 7
    %v216 = vsel %vm210, %v215, %v116
    %v217 = vrot.slane %v24, 7
    %v218 = vsel %vm210, %v217, %v117
    %v219 = vrot.slane %v26, 7
    %v220 = vsel %vm210, %v219, %v118
    %v221 = vrot.slane %v28, 7
    %v222 = vsel %vm210, %v221, %v119
    %v223 = vrot.slane %v30, 7
    %v224 = vsel %vm210, %v223, %v120
    %v225 = vrot.slane %v32, 7
    %v226 = vsel %vm210, %v225, %v121
    %v227 = vrot.slane %v34, 7
    %v228 = vsel %vm210, %v227, %v122
    %v229 = vrot.slane %v36, 7
    %v230 = vsel %vm210, %v229, %v123
    %v231 = vrot.slane %v38, 7
    %v232 = vsel %vm210, %v231, %v124
    %v233 = vrot.slane %v40, 7
    %v234 = vsel %vm210, %v233, %v125
    %v235 = vrot.slane %v42, 7
    %v236 = vsel %vm210, %v235, %v126
    %v237 = vrot.slane %v44, 7
    %v238 = vsel %vm210, %v237, %v127
    %v239 = vrot.slane %v46, 7
    %v240 = vsel %vm210, %v239, %v128
    %v241 = vrot.slane %v48, 7
    %v242 = vsel %vm210, %v241, %v129
    %v243 = vrot.slane %v50, 7
    %v244 = vsel %vm210, %v243, %v130
    %v245 = vrot.slane %v52, 7
    %v246 = vsel %vm210, %v245, %v131
    %v247 = vrot.slane %v54, 7
    %v248 = vsel %vm210, %v247, %v132
    %v249 = vrot.slane %v56, 7
    %v250 = vsel %vm210, %v249, %v133
    %v251 = vrot.slane %v58, 7
    %v252 = vsel %vm210, %v251, %v134
    %v253 = vrot.slane %v60, 7
    %v254 = vsel %vm210, %v253, %v135
    %v255 = vrot.slane %v62, 7
    %v256 = vsel %vm210, %v255, %v136
    %v257 = vrot.slane %v64, 7
    %v258 = vsel %vm210, %v257, %v137
    %v259 = vrot.slane %v66, 7
    %v260 = vsel %vm210, %v259, %v138
    %v261 = vrot.slane %v68, 7
    %v262 = vsel %vm210, %v261, %v139
    %v263 = vrot.slane %v70, 7
    %v264 = vsel %vm210, %v263, %v140
    %v265 = vrot.slane %v72, 7
    %v266 = vsel %vm210, %v265, %v141
    %v267 = vrot.slane %v74, 7
    %v268 = vsel %vm210, %v267, %v142
    %v269 = vrot.slane %v76, 7
    %v270 = vsel %vm210, %v269, %v143
    %v271 = vrot.slane %v78, 7
    %v272 = vsel %vm210, %v271, %v144
    %v273 = vrot.slane %v80, 7
    %v274 = vsel %vm210, %v273, %v145
    %v339 = vsel %vm210, %v114, %v211
    %v340 = vsel %vm210, %v115, %v213
    %v341 = vsel %vm210, %v116, %v215
    %v342 = vsel %vm210, %v117, %v217
    %v343 = vsel %vm210, %v118, %v219
    %v344 = vsel %vm210, %v119, %v221
    %v345 = vsel %vm210, %v120, %v223
    %v346 = vsel %vm210, %v121, %v225
    %v347 = vsel %vm210, %v122, %v227
    %v348 = vsel %vm210, %v123, %v229
    %v349 = vsel %vm210, %v124, %v231
    %v350 = vsel %vm210, %v125, %v233
    %v351 = vsel %vm210, %v126, %v235
    %v352 = vsel %vm210, %v127, %v237
    %v353 = vsel %vm210, %v128, %v239
    %v354 = vsel %vm210, %v129, %v241
    %v355 = vsel %vm210, %v130, %v243
    %v356 = vsel %vm210, %v131, %v245
    %v357 = vsel %vm210, %v132, %v247
    %v358 = vsel %vm210, %v133, %v249
    %v359 = vsel %vm210, %v134, %v251
    %v360 = vsel %vm210, %v135, %v253
    %v361 = vsel %vm210, %v136, %v255
    %v362 = vsel %vm210, %v137, %v257
    %v363 = vsel %vm210, %v138, %v259
    %v364 = vsel %vm210, %v139, %v261
    %v365 = vsel %vm210, %v140, %v263
    %v366 = vsel %vm210, %v141, %v265
    %v367 = vsel %vm210, %v142, %v267
    %v368 = vsel %vm210, %v143, %v269
    %v369 = vsel %vm210, %v144, %v271
    %v370 = vsel %vm210, %v145, %v273
    %vm403 = vcmask 1046528
    %v404 = vrot.slane %v354, 1
    %v405 = vrot.slane %v242, 1
    %v406 = vsel %vm403, %v404, %v405
    %v407 = vsel %vm403, %v405, %v404
    %v408 = vrot.slane %v339, 1
    %v409 = vrot.slane %v212, 1
    %v410 = vsel %vm403, %v408, %v409
    %v411 = vsel %vm403, %v409, %v408
    %v412 = vrot.slane %v340, 1
    %v413 = vrot.slane %v214, 1
    %v414 = vsel %vm403, %v412, %v413
    %v415 = vsel %vm403, %v413, %v412
    %v416 = vrot.slane %v341, 1
    %v417 = vrot.slane %v216, 1
    %v418 = vsel %vm403, %v416, %v417
    %v419 = vsel %vm403, %v417, %v416
    %v420 = vrot.slane %v342, 1
    %v421 = vrot.slane %v218, 1
    %v422 = vsel %vm403, %v420, %v421
    %v423 = vsel %vm403, %v421, %v420
    %v424 = vrot.slane %v343, 1
    %v425 = vrot.slane %v220, 1
    %v426 = vsel %vm403, %v424, %v425
    %v427 = vsel %vm403, %v425, %v424
    %v428 = vrot.slane %v344, 1
    %v429 = vrot.slane %v222, 1
    %v430 = vsel %vm403, %v428, %v429
    %v431 = vsel %vm403, %v429, %v428
    %v432 = vrot.slane %v345, 1
    %v433 = vrot.slane %v224, 1
    %v434 = vsel %vm403, %v432, %v433
    %v435 = vsel %vm403, %v433, %v432
    %v436 = vrot.slane %v346, 1
    %v437 = vrot.slane %v226, 1
    %v438 = vsel %vm403, %v436, %v437
    %v439 = vsel %vm403, %v437, %v436
    %v440 = vrot.slane %v347, 1
    %v441 = vrot.slane %v228, 1
    %v442 = vsel %vm403, %v440, %v441
    %v443 = vsel %vm403, %v441, %v440
    %v444 = vrot.slane %v348, 1
    %v445 = vrot.slane %v230, 1
    %v446 = vsel %vm403, %v444, %v445
    %v447 = vsel %vm403, %v445, %v444
    %v448 = vrot.slane %v349, 1
    %v449 = vrot.slane %v232, 1
    %v450 = vsel %vm403, %v448, %v449
    %v451 = vsel %vm403, %v449, %v448
    %v452 = vrot.slane %v350, 1
    %v453 = vrot.slane %v234, 1
    %v454 = vsel %vm403, %v452, %v453
    %v455 = vsel %vm403, %v453, %v452
    %v456 = vrot.slane %v351, 1
    %v457 = vrot.slane %v236, 1
    %v458 = vsel %vm403, %v456, %v457
    %v459 = vsel %vm403, %v457, %v456
    %v460 = vrot.slane %v352, 1
    %v461 = vrot.slane %v238, 1
    %v462 = vsel %vm403, %v460, %v461
    %v463 = vsel %vm403, %v461, %v460
    %v464 = vrot.slane %v353, 1
    %v465 = vrot.slane %v240, 1
    %v466 = vsel %vm403, %v464, %v465
    %v467 = vsel %vm403, %v465, %v464
    %v468 = vrot.slane %v370, 1
    %v469 = vrot.slane %v274, 1
    %v470 = vsel %vm403, %v468, %v469
    %v471 = vsel %vm403, %v469, %v468
    %v472 = vrot.slane %v355, 1
    %v473 = vrot.slane %v244, 1
    %v474 = vsel %vm403, %v472, %v473
    %v475 = vsel %vm403, %v473, %v472
    %v476 = vrot.slane %v356, 1
    %v477 = vrot.slane %v246, 1
    %v478 = vsel %vm403, %v476, %v477
    %v479 = vsel %vm403, %v477, %v476
    %v480 = vrot.slane %v357, 1
    %v481 = vrot.slane %v248, 1
    %v482 = vsel %vm403, %v480, %v481
    %v483 = vsel %vm403, %v481, %v480
    %v484 = vrot.slane %v358, 1
    %v485 = vrot.slane %v250, 1
    %v486 = vsel %vm403, %v484, %v485
    %v487 = vsel %vm403, %v485, %v484
    %v488 = vrot.slane %v359, 1
    %v489 = vrot.slane %v252, 1
    %v490 = vsel %vm403, %v488, %v489
    %v491 = vsel %vm403, %v489, %v488
    %v492 = vrot.slane %v360, 1
    %v493 = vrot.slane %v254, 1
    %v494 = vsel %vm403, %v492, %v493
    %v495 = vsel %vm403, %v493, %v492
    %v496 = vrot.slane %v361, 1
    %v497 = vrot.slane %v256, 1
    %v498 = vsel %vm403, %v496, %v497
    %v499 = vsel %vm403, %v497, %v496
    %v500 = vrot.slane %v362, 1
    %v501 = vrot.slane %v258, 1
    %v502 = vsel %vm403, %v500, %v501
    %v503 = vsel %vm403, %v501, %v500
    %v504 = vrot.slane %v363, 1
    %v505 = vrot.slane %v260, 1
    %v506 = vsel %vm403, %v504, %v505
    %v507 = vsel %vm403, %v505, %v504
    %v508 = vrot.slane %v364, 1
    %v509 = vrot.slane %v262, 1
    %v510 = vsel %vm403, %v508, %v509
    %v511 = vsel %vm403, %v509, %v508
    %v512 = vrot.slane %v365, 1
    %v513 = vrot.slane %v264, 1
    %v514 = vsel %vm403, %v512, %v513
    %v515 = vsel %vm403, %v513, %v512
    %v516 = vrot.slane %v366, 1
    %v517 = vrot.slane %v266, 1
    %v518 = vsel %vm403, %v516, %v517
    %v519 = vsel %vm403, %v517, %v516
    %v520 = vrot.slane %v367, 1
    %v521 = vrot.slane %v268, 1
    %v522 = vsel %vm403, %v520, %v521
    %v523 = vsel %vm403, %v521, %v520
    %v524 = vrot.slane %v368, 1
    %v525 = vrot.slane %v270, 1
    %v526 = vsel %vm403, %v524, %v525
    %v527 = vsel %vm403, %v525, %v524
    %v528 = vrot.slane %v369, 1
    %v529 = vrot.slane %v272, 1
    %v530 = vsel %vm403, %v528, %v529
    %v531 = vsel %vm403, %v529, %v528
    %532 = vrot.lane.b32.xlu0 %v406, 4
    %v533 = vpop.permute.xlu0 %532
    %534 = vrot.lane.b32.xlu0 %v407, 4
    %v535 = vpop.permute.xlu0 %534
    %536 = vrot.lane.b32.xlu0 %v410, 4
    %v537 = vpop.permute.xlu0 %536
    %538 = vrot.lane.b32.xlu0 %v411, 4
    %v539 = vpop.permute.xlu0 %538
    %540 = vrot.lane.b32.xlu0 %v414, 4
    %v541 = vpop.permute.xlu0 %540
    %542 = vrot.lane.b32.xlu0 %v415, 4
    %v543 = vpop.permute.xlu0 %542
    %544 = vrot.lane.b32.xlu0 %v418, 4
    %v545 = vpop.permute.xlu0 %544
    %546 = vrot.lane.b32.xlu0 %v419, 4
    %v547 = vpop.permute.xlu0 %546
    %548 = vrot.lane.b32.xlu0 %v422, 4
    %v549 = vpop.permute.xlu0 %548
    %550 = vrot.lane.b32.xlu0 %v423, 4
    %v551 = vpop.permute.xlu0 %550
    %552 = vrot.lane.b32.xlu0 %v426, 4
    %v553 = vpop.permute.xlu0 %552
    %554 = vrot.lane.b32.xlu0 %v427, 4
    %v555 = vpop.permute.xlu0 %554
    %556 = vrot.lane.b32.xlu0 %v430, 4
    %v557 = vpop.permute.xlu0 %556
    %558 = vrot.lane.b32.xlu0 %v431, 4
    %v559 = vpop.permute.xlu0 %558
    %560 = vrot.lane.b32.xlu0 %v434, 4
    %v561 = vpop.permute.xlu0 %560
    %562 = vrot.lane.b32.xlu0 %v435, 4
    %v563 = vpop.permute.xlu0 %562
    %564 = vrot.lane.b32.xlu0 %v438, 4
    %v565 = vpop.permute.xlu0 %564
    %566 = vrot.lane.b32.xlu0 %v439, 4
    %v567 = vpop.permute.xlu0 %566
    %568 = vrot.lane.b32.xlu0 %v442, 4
    %v569 = vpop.permute.xlu0 %568
    %570 = vrot.lane.b32.xlu0 %v443, 4
    %v571 = vpop.permute.xlu0 %570
    %572 = vrot.lane.b32.xlu0 %v446, 4
    %v573 = vpop.permute.xlu0 %572
    %574 = vrot.lane.b32.xlu0 %v447, 4
    %v575 = vpop.permute.xlu0 %574
    %576 = vrot.lane.b32.xlu0 %v450, 4
    %v577 = vpop.permute.xlu0 %576
    %578 = vrot.lane.b32.xlu0 %v451, 4
    %v579 = vpop.permute.xlu0 %578
    %580 = vrot.lane.b32.xlu0 %v454, 4
    %v581 = vpop.permute.xlu0 %580
    %582 = vrot.lane.b32.xlu0 %v455, 4
    %v583 = vpop.permute.xlu0 %582
    %584 = vrot.lane.b32.xlu0 %v458, 4
    %v585 = vpop.permute.xlu0 %584
    %586 = vrot.lane.b32.xlu0 %v459, 4
    %v587 = vpop.permute.xlu0 %586
    %588 = vrot.lane.b32.xlu0 %v462, 4
    %v589 = vpop.permute.xlu0 %588
    %590 = vrot.lane.b32.xlu0 %v463, 4
    %v591 = vpop.permute.xlu0 %590
    %592 = vrot.lane.b32.xlu0 %v466, 4
    %v593 = vpop.permute.xlu0 %592
    %594 = vrot.lane.b32.xlu0 %v467, 4
    %v595 = vpop.permute.xlu0 %594
    %596 = vrot.lane.b32.xlu0 %v470, 4
    %v597 = vpop.permute.xlu0 %596
    %598 = vrot.lane.b32.xlu0 %v471, 4
    %v599 = vpop.permute.xlu0 %598
    %600 = vrot.lane.b32.xlu0 %v474, 4
    %v601 = vpop.permute.xlu0 %600
    %602 = vrot.lane.b32.xlu0 %v475, 4
    %v603 = vpop.permute.xlu0 %602
    %604 = vrot.lane.b32.xlu0 %v478, 4
    %v605 = vpop.permute.xlu0 %604
    %606 = vrot.lane.b32.xlu0 %v479, 4
    %v607 = vpop.permute.xlu0 %606
    %608 = vrot.lane.b32.xlu0 %v482, 4
    %v609 = vpop.permute.xlu0 %608
    %610 = vrot.lane.b32.xlu0 %v483, 4
    %v611 = vpop.permute.xlu0 %610
    %612 = vrot.lane.b32.xlu0 %v486, 4
    %v613 = vpop.permute.xlu0 %612
    %614 = vrot.lane.b32.xlu0 %v487, 4
    %v615 = vpop.permute.xlu0 %614
    %616 = vrot.lane.b32.xlu0 %v490, 4
    %v617 = vpop.permute.xlu0 %616
    %618 = vrot.lane.b32.xlu0 %v491, 4
    %v619 = vpop.permute.xlu0 %618
    %620 = vrot.lane.b32.xlu0 %v494, 4
    %v621 = vpop.permute.xlu0 %620
    %622 = vrot.lane.b32.xlu0 %v495, 4
    %v623 = vpop.permute.xlu0 %622
    %624 = vrot.lane.b32.xlu0 %v498, 4
    %v625 = vpop.permute.xlu0 %624
    %626 = vrot.lane.b32.xlu0 %v499, 4
    %v627 = vpop.permute.xlu0 %626
    %628 = vrot.lane.b32.xlu0 %v502, 4
    %v629 = vpop.permute.xlu0 %628
    %630 = vrot.lane.b32.xlu0 %v503, 4
    %v631 = vpop.permute.xlu0 %630
    %632 = vrot.lane.b32.xlu0 %v506, 4
    %v633 = vpop.permute.xlu0 %632
    %634 = vrot.lane.b32.xlu0 %v507, 4
    %v635 = vpop.permute.xlu0 %634
    %636 = vrot.lane.b32.xlu0 %v510, 4
    %v637 = vpop.permute.xlu0 %636
    %638 = vrot.lane.b32.xlu0 %v511, 4
    %v639 = vpop.permute.xlu0 %638
    %640 = vrot.lane.b32.xlu0 %v514, 4
    %v641 = vpop.permute.xlu0 %640
    %642 = vrot.lane.b32.xlu0 %v515, 4
    %v643 = vpop.permute.xlu0 %642
    %644 = vrot.lane.b32.xlu0 %v518, 4
    %v645 = vpop.permute.xlu0 %644
    %646 = vrot.lane.b32.xlu0 %v519, 4
    %v647 = vpop.permute.xlu0 %646
    %648 = vrot.lane.b32.xlu0 %v522, 4
    %v649 = vpop.permute.xlu0 %648
    %650 = vrot.lane.b32.xlu0 %v523, 4
    %v651 = vpop.permute.xlu0 %650
    %652 = vrot.lane.b32.xlu0 %v526, 4
    %v653 = vpop.permute.xlu0 %652
    %654 = vrot.lane.b32.xlu0 %v527, 4
    %v655 = vpop.permute.xlu0 %654
    %656 = vrot.lane.b32.xlu0 %v530, 4
    %v657 = vpop.permute.xlu0 %656
    %658 = vrot.lane.b32.xlu0 %v531, 4
    %v659 = vpop.permute.xlu0 %658
    %vm724 = vcmask 1045504
    %v725 = vrot.slane %v354, 2
    %v726 = vrot.slane %v242, 2
    %v727 = vsel %vm724, %v725, %v726
    %v728 = vsel %vm724, %v726, %v725
    %v729 = vrot.slane %v339, 2
    %v730 = vrot.slane %v212, 2
    %v731 = vsel %vm724, %v729, %v730
    %v732 = vsel %vm724, %v730, %v729
    %v733 = vrot.slane %v340, 2
    %v734 = vrot.slane %v214, 2
    %v735 = vsel %vm724, %v733, %v734
    %v736 = vsel %vm724, %v734, %v733
    %v737 = vrot.slane %v341, 2
    %v738 = vrot.slane %v216, 2
    %v739 = vsel %vm724, %v737, %v738
    %v740 = vsel %vm724, %v738, %v737
    %v741 = vrot.slane %v342, 2
    %v742 = vrot.slane %v218, 2
    %v743 = vsel %vm724, %v741, %v742
    %v744 = vsel %vm724, %v742, %v741
    %v745 = vrot.slane %v343, 2
    %v746 = vrot.slane %v220, 2
    %v747 = vsel %vm724, %v745, %v746
    %v748 = vsel %vm724, %v746, %v745
    %v749 = vrot.slane %v344, 2
    %v750 = vrot.slane %v222, 2
    %v751 = vsel %vm724, %v749, %v750
    %v752 = vsel %vm724, %v750, %v749
    %v753 = vrot.slane %v345, 2
    %v754 = vrot.slane %v224, 2
    %v755 = vsel %vm724, %v753, %v754
    %v756 = vsel %vm724, %v754, %v753
    %v757 = vrot.slane %v346, 2
    %v758 = vrot.slane %v226, 2
    %v759 = vsel %vm724, %v757, %v758
    %v760 = vsel %vm724, %v758, %v757
    %v761 = vrot.slane %v347, 2
    %v762 = vrot.slane %v228, 2
    %v763 = vsel %vm724, %v761, %v762
    %v764 = vsel %vm724, %v762, %v761
    %v765 = vrot.slane %v348, 2
    %v766 = vrot.slane %v230, 2
    %v767 = vsel %vm724, %v765, %v766
    %v768 = vsel %vm724, %v766, %v765
    %v769 = vrot.slane %v349, 2
    %v770 = vrot.slane %v232, 2
    %v771 = vsel %vm724, %v769, %v770
    %v772 = vsel %vm724, %v770, %v769
    %v773 = vrot.slane %v350, 2
    %v774 = vrot.slane %v234, 2
    %v775 = vsel %vm724, %v773, %v774
    %v776 = vsel %vm724, %v774, %v773
    %v777 = vrot.slane %v351, 2
    %v778 = vrot.slane %v236, 2
    %v779 = vsel %vm724, %v777, %v778
    %v780 = vsel %vm724, %v778, %v777
    %v781 = vrot.slane %v352, 2
    %v782 = vrot.slane %v238, 2
    %v783 = vsel %vm724, %v781, %v782
    %v784 = vsel %vm724, %v782, %v781
    %v785 = vrot.slane %v353, 2
    %v786 = vrot.slane %v240, 2
    %v787 = vsel %vm724, %v785, %v786
    %v788 = vsel %vm724, %v786, %v785
    %v789 = vrot.slane %v370, 2
    %v790 = vrot.slane %v274, 2
    %v791 = vsel %vm724, %v789, %v790
    %v792 = vsel %vm724, %v790, %v789
    %v793 = vrot.slane %v355, 2
    %v794 = vrot.slane %v244, 2
    %v795 = vsel %vm724, %v793, %v794
    %v796 = vsel %vm724, %v794, %v793
    %v797 = vrot.slane %v356, 2
    %v798 = vrot.slane %v246, 2
    %v799 = vsel %vm724, %v797, %v798
    %v800 = vsel %vm724, %v798, %v797
    %v801 = vrot.slane %v357, 2
    %v802 = vrot.slane %v248, 2
    %v803 = vsel %vm724, %v801, %v802
    %v804 = vsel %vm724, %v802, %v801
    %v805 = vrot.slane %v358, 2
    %v806 = vrot.slane %v250, 2
    %v807 = vsel %vm724, %v805, %v806
    %v808 = vsel %vm724, %v806, %v805
    %v809 = vrot.slane %v359, 2
    %v810 = vrot.slane %v252, 2
    %v811 = vsel %vm724, %v809, %v810
    %v812 = vsel %vm724, %v810, %v809
    %v813 = vrot.slane %v360, 2
    %v814 = vrot.slane %v254, 2
    %v815 = vsel %vm724, %v813, %v814
    %v816 = vsel %vm724, %v814, %v813
    %v817 = vrot.slane %v361, 2
    %v818 = vrot.slane %v256, 2
    %v819 = vsel %vm724, %v817, %v818
    %v820 = vsel %vm724, %v818, %v817
    %v821 = vrot.slane %v362, 2
    %v822 = vrot.slane %v258, 2
    %v823 = vsel %vm724, %v821, %v822
    %v824 = vsel %vm724, %v822, %v821
    %v825 = vrot.slane %v363, 2
    %v826 = vrot.slane %v260, 2
    %v827 = vsel %vm724, %v825, %v826
    %v828 = vsel %vm724, %v826, %v825
    %v829 = vrot.slane %v364, 2
    %v830 = vrot.slane %v262, 2
    %v831 = vsel %vm724, %v829, %v830
    %v832 = vsel %vm724, %v830, %v829
    %v833 = vrot.slane %v365, 2
    %v834 = vrot.slane %v264, 2
    %v835 = vsel %vm724, %v833, %v834
    %v836 = vsel %vm724, %v834, %v833
    %v837 = vrot.slane %v366, 2
    %v838 = vrot.slane %v266, 2
    %v839 = vsel %vm724, %v837, %v838
    %v840 = vsel %vm724, %v838, %v837
    %v841 = vrot.slane %v367, 2
    %v842 = vrot.slane %v268, 2
    %v843 = vsel %vm724, %v841, %v842
    %v844 = vsel %vm724, %v842, %v841
    %v845 = vrot.slane %v368, 2
    %v846 = vrot.slane %v270, 2
    %v847 = vsel %vm724, %v845, %v846
    %v848 = vsel %vm724, %v846, %v845
    %v849 = vrot.slane %v369, 2
    %v850 = vrot.slane %v272, 2
    %v851 = vsel %vm724, %v849, %v850
    %v852 = vsel %vm724, %v850, %v849
    %853 = vrot.lane.b32.xlu0 %v727, 8
    %v854 = vpop.permute.xlu0 %853
    %855 = vrot.lane.b32.xlu0 %v728, 8
    %v856 = vpop.permute.xlu0 %855
    %857 = vrot.lane.b32.xlu0 %v731, 8
    %v858 = vpop.permute.xlu0 %857
    %859 = vrot.lane.b32.xlu0 %v732, 8
    %v860 = vpop.permute.xlu0 %859
    %861 = vrot.lane.b32.xlu0 %v735, 8
    %v862 = vpop.permute.xlu0 %861
    %863 = vrot.lane.b32.xlu0 %v736, 8
    %v864 = vpop.permute.xlu0 %863
    %865 = vrot.lane.b32.xlu0 %v739, 8
    %v866 = vpop.permute.xlu0 %865
    %867 = vrot.lane.b32.xlu0 %v740, 8
    %v868 = vpop.permute.xlu0 %867
    %869 = vrot.lane.b32.xlu0 %v743, 8
    %v870 = vpop.permute.xlu0 %869
    %871 = vrot.lane.b32.xlu0 %v744, 8
    %v872 = vpop.permute.xlu0 %871
    %873 = vrot.lane.b32.xlu0 %v747, 8
    %v874 = vpop.permute.xlu0 %873
    %875 = vrot.lane.b32.xlu0 %v748, 8
    %v876 = vpop.permute.xlu0 %875
    %877 = vrot.lane.b32.xlu0 %v751, 8
    %v878 = vpop.permute.xlu0 %877
    %879 = vrot.lane.b32.xlu0 %v752, 8
    %v880 = vpop.permute.xlu0 %879
    %881 = vrot.lane.b32.xlu0 %v755, 8
    %v882 = vpop.permute.xlu0 %881
    %883 = vrot.lane.b32.xlu0 %v756, 8
    %v884 = vpop.permute.xlu0 %883
    %885 = vrot.lane.b32.xlu0 %v759, 8
    %v886 = vpop.permute.xlu0 %885
    %887 = vrot.lane.b32.xlu0 %v760, 8
    %v888 = vpop.permute.xlu0 %887
    %889 = vrot.lane.b32.xlu0 %v763, 8
    %v890 = vpop.permute.xlu0 %889
    %891 = vrot.lane.b32.xlu0 %v764, 8
    %v892 = vpop.permute.xlu0 %891
    %893 = vrot.lane.b32.xlu0 %v767, 8
    %v894 = vpop.permute.xlu0 %893
    %895 = vrot.lane.b32.xlu0 %v768, 8
    %v896 = vpop.permute.xlu0 %895
    %897 = vrot.lane.b32.xlu0 %v771, 8
    %v898 = vpop.permute.xlu0 %897
    %899 = vrot.lane.b32.xlu0 %v772, 8
    %v900 = vpop.permute.xlu0 %899
    %901 = vrot.lane.b32.xlu0 %v775, 8
    %v902 = vpop.permute.xlu0 %901
    %903 = vrot.lane.b32.xlu0 %v776, 8
    %v904 = vpop.permute.xlu0 %903
    %905 = vrot.lane.b32.xlu0 %v779, 8
    %v906 = vpop.permute.xlu0 %905
    %907 = vrot.lane.b32.xlu0 %v780, 8
    %v908 = vpop.permute.xlu0 %907
    %909 = vrot.lane.b32.xlu0 %v783, 8
    %v910 = vpop.permute.xlu0 %909
    %911 = vrot.lane.b32.xlu0 %v784, 8
    %v912 = vpop.permute.xlu0 %911
    %913 = vrot.lane.b32.xlu0 %v787, 8
    %v914 = vpop.permute.xlu0 %913
    %915 = vrot.lane.b32.xlu0 %v788, 8
    %v916 = vpop.permute.xlu0 %915
    %917 = vrot.lane.b32.xlu0 %v791, 8
    %v918 = vpop.permute.xlu0 %917
    %919 = vrot.lane.b32.xlu0 %v792, 8
    %v920 = vpop.permute.xlu0 %919
    %921 = vrot.lane.b32.xlu0 %v795, 8
    %v922 = vpop.permute.xlu0 %921
    %923 = vrot.lane.b32.xlu0 %v796, 8
    %v924 = vpop.permute.xlu0 %923
    %925 = vrot.lane.b32.xlu0 %v799, 8
    %v926 = vpop.permute.xlu0 %925
    %927 = vrot.lane.b32.xlu0 %v800, 8
    %v928 = vpop.permute.xlu0 %927
    %929 = vrot.lane.b32.xlu0 %v803, 8
    %v930 = vpop.permute.xlu0 %929
    %931 = vrot.lane.b32.xlu0 %v804, 8
    %v932 = vpop.permute.xlu0 %931
    %933 = vrot.lane.b32.xlu0 %v807, 8
    %v934 = vpop.permute.xlu0 %933
    %935 = vrot.lane.b32.xlu0 %v808, 8
    %v936 = vpop.permute.xlu0 %935
    %937 = vrot.lane.b32.xlu0 %v811, 8
    %v938 = vpop.permute.xlu0 %937
    %939 = vrot.lane.b32.xlu0 %v812, 8
    %v940 = vpop.permute.xlu0 %939
    %941 = vrot.lane.b32.xlu0 %v815, 8
    %v942 = vpop.permute.xlu0 %941
    %943 = vrot.lane.b32.xlu0 %v816, 8
    %v944 = vpop.permute.xlu0 %943
    %945 = vrot.lane.b32.xlu0 %v819, 8
    %v946 = vpop.permute.xlu0 %945
    %947 = vrot.lane.b32.xlu0 %v820, 8
    %v948 = vpop.permute.xlu0 %947
    %949 = vrot.lane.b32.xlu0 %v823, 8
    %v950 = vpop.permute.xlu0 %949
    %951 = vrot.lane.b32.xlu0 %v824, 8
    %v952 = vpop.permute.xlu0 %951
    %953 = vrot.lane.b32.xlu0 %v827, 8
    %v954 = vpop.permute.xlu0 %953
    %955 = vrot.lane.b32.xlu0 %v828, 8
    %v956 = vpop.permute.xlu0 %955
    %957 = vrot.lane.b32.xlu0 %v831, 8
    %v958 = vpop.permute.xlu0 %957
    %959 = vrot.lane.b32.xlu0 %v832, 8
    %v960 = vpop.permute.xlu0 %959
    %961 = vrot.lane.b32.xlu0 %v835, 8
    %v962 = vpop.permute.xlu0 %961
    %963 = vrot.lane.b32.xlu0 %v836, 8
    %v964 = vpop.permute.xlu0 %963
    %965 = vrot.lane.b32.xlu0 %v839, 8
    %v966 = vpop.permute.xlu0 %965
    %967 = vrot.lane.b32.xlu0 %v840, 8
    %v968 = vpop.permute.xlu0 %967
    %969 = vrot.lane.b32.xlu0 %v843, 8
    %v970 = vpop.permute.xlu0 %969
    %971 = vrot.lane.b32.xlu0 %v844, 8
    %v972 = vpop.permute.xlu0 %971
    %973 = vrot.lane.b32.xlu0 %v847, 8
    %v974 = vpop.permute.xlu0 %973
    %975 = vrot.lane.b32.xlu0 %v848, 8
    %v976 = vpop.permute.xlu0 %975
    %977 = vrot.lane.b32.xlu0 %v851, 8
    %v978 = vpop.permute.xlu0 %977
    %979 = vrot.lane.b32.xlu0 %v852, 8
    %v980 = vpop.permute.xlu0 %979
    %1045 = vrot.lane.b32.xlu0 %v339, 12
    %v1046 = vpop.permute.xlu0 %1045
    %1047 = vrot.lane.b32.xlu0 %v212, 12
    %v1048 = vpop.permute.xlu0 %1047
    %1049 = vrot.lane.b32.xlu0 %v340, 12
    %v1050 = vpop.permute.xlu0 %1049
    %1051 = vrot.lane.b32.xlu0 %v214, 12
    %v1052 = vpop.permute.xlu0 %1051
    %1053 = vrot.lane.b32.xlu0 %v341, 12
    %v1054 = vpop.permute.xlu0 %1053
    %1055 = vrot.lane.b32.xlu0 %v216, 12
    %v1056 = vpop.permute.xlu0 %1055
    %1057 = vrot.lane.b32.xlu0 %v342, 12
    %v1058 = vpop.permute.xlu0 %1057
    %1059 = vrot.lane.b32.xlu0 %v218, 12
    %v1060 = vpop.permute.xlu0 %1059
    %1061 = vrot.lane.b32.xlu0 %v343, 12
    %v1062 = vpop.permute.xlu0 %1061
    %1063 = vrot.lane.b32.xlu0 %v220, 12
    %v1064 = vpop.permute.xlu0 %1063
    %1065 = vrot.lane.b32.xlu0 %v344, 12
    %v1066 = vpop.permute.xlu0 %1065
    %1067 = vrot.lane.b32.xlu0 %v222, 12
    %v1068 = vpop.permute.xlu0 %1067
    %1069 = vrot.lane.b32.xlu0 %v345, 12
    %v1070 = vpop.permute.xlu0 %1069
    %1071 = vrot.lane.b32.xlu0 %v224, 12
    %v1072 = vpop.permute.xlu0 %1071
    %1073 = vrot.lane.b32.xlu0 %v346, 12
    %v1074 = vpop.permute.xlu0 %1073
    %1075 = vrot.lane.b32.xlu0 %v226, 12
    %v1076 = vpop.permute.xlu0 %1075
    %1077 = vrot.lane.b32.xlu0 %v347, 12
    %v1078 = vpop.permute.xlu0 %1077
    %1079 = vrot.lane.b32.xlu0 %v228, 12
    %v1080 = vpop.permute.xlu0 %1079
    %1081 = vrot.lane.b32.xlu0 %v348, 12
    %v1082 = vpop.permute.xlu0 %1081
    %1083 = vrot.lane.b32.xlu0 %v230, 12
    %v1084 = vpop.permute.xlu0 %1083
    %1085 = vrot.lane.b32.xlu0 %v349, 12
    %v1086 = vpop.permute.xlu0 %1085
    %1087 = vrot.lane.b32.xlu0 %v232, 12
    %v1088 = vpop.permute.xlu0 %1087
    %1089 = vrot.lane.b32.xlu0 %v350, 12
    %v1090 = vpop.permute.xlu0 %1089
    %1091 = vrot.lane.b32.xlu0 %v234, 12
    %v1092 = vpop.permute.xlu0 %1091
    %1093 = vrot.lane.b32.xlu0 %v351, 12
    %v1094 = vpop.permute.xlu0 %1093
    %1095 = vrot.lane.b32.xlu0 %v236, 12
    %v1096 = vpop.permute.xlu0 %1095
    %1097 = vrot.lane.b32.xlu0 %v352, 12
    %v1098 = vpop.permute.xlu0 %1097
    %1099 = vrot.lane.b32.xlu0 %v238, 12
    %v1100 = vpop.permute.xlu0 %1099
    %1101 = vrot.lane.b32.xlu0 %v353, 12
    %v1102 = vpop.permute.xlu0 %1101
    %1103 = vrot.lane.b32.xlu0 %v240, 12
    %v1104 = vpop.permute.xlu0 %1103
    %1105 = vrot.lane.b32.xlu0 %v354, 12
    %v1106 = vpop.permute.xlu0 %1105
    %1107 = vrot.lane.b32.xlu0 %v242, 12
    %v1108 = vpop.permute.xlu0 %1107
    %1109 = vrot.lane.b32.xlu0 %v355, 12
    %v1110 = vpop.permute.xlu0 %1109
    %1111 = vrot.lane.b32.xlu0 %v244, 12
    %v1112 = vpop.permute.xlu0 %1111
    %1113 = vrot.lane.b32.xlu0 %v356, 12
    %v1114 = vpop.permute.xlu0 %1113
    %1115 = vrot.lane.b32.xlu0 %v246, 12
    %v1116 = vpop.permute.xlu0 %1115
    %1117 = vrot.lane.b32.xlu0 %v357, 12
    %v1118 = vpop.permute.xlu0 %1117
    %1119 = vrot.lane.b32.xlu0 %v248, 12
    %v1120 = vpop.permute.xlu0 %1119
    %1121 = vrot.lane.b32.xlu0 %v358, 12
    %v1122 = vpop.permute.xlu0 %1121
    %1123 = vrot.lane.b32.xlu0 %v250, 12
    %v1124 = vpop.permute.xlu0 %1123
    %1125 = vrot.lane.b32.xlu0 %v359, 12
    %v1126 = vpop.permute.xlu0 %1125
    %1127 = vrot.lane.b32.xlu0 %v252, 12
    %v1128 = vpop.permute.xlu0 %1127
    %1129 = vrot.lane.b32.xlu0 %v360, 12
    %v1130 = vpop.permute.xlu0 %1129
    %1131 = vrot.lane.b32.xlu0 %v254, 12
    %v1132 = vpop.permute.xlu0 %1131
    %1133 = vrot.lane.b32.xlu0 %v361, 12
    %v1134 = vpop.permute.xlu0 %1133
    %1135 = vrot.lane.b32.xlu0 %v256, 12
    %v1136 = vpop.permute.xlu0 %1135
    %1137 = vrot.lane.b32.xlu0 %v362, 12
    %v1138 = vpop.permute.xlu0 %1137
    %1139 = vrot.lane.b32.xlu0 %v258, 12
    %v1140 = vpop.permute.xlu0 %1139
    %1141 = vrot.lane.b32.xlu0 %v363, 12
    %v1142 = vpop.permute.xlu0 %1141
    %1143 = vrot.lane.b32.xlu0 %v260, 12
    %v1144 = vpop.permute.xlu0 %1143
    %1145 = vrot.lane.b32.xlu0 %v364, 12
    %v1146 = vpop.permute.xlu0 %1145
    %1147 = vrot.lane.b32.xlu0 %v262, 12
    %v1148 = vpop.permute.xlu0 %1147
    %1149 = vrot.lane.b32.xlu0 %v365, 12
    %v1150 = vpop.permute.xlu0 %1149
    %1151 = vrot.lane.b32.xlu0 %v264, 12
    %v1152 = vpop.permute.xlu0 %1151
    %1153 = vrot.lane.b32.xlu0 %v366, 12
    %v1154 = vpop.permute.xlu0 %1153
    %1155 = vrot.lane.b32.xlu0 %v266, 12
    %v1156 = vpop.permute.xlu0 %1155
    %1157 = vrot.lane.b32.xlu0 %v367, 12
    %v1158 = vpop.permute.xlu0 %1157
    %1159 = vrot.lane.b32.xlu0 %v268, 12
    %v1160 = vpop.permute.xlu0 %1159
    %1161 = vrot.lane.b32.xlu0 %v368, 12
    %v1162 = vpop.permute.xlu0 %1161
    %1163 = vrot.lane.b32.xlu0 %v270, 12
    %v1164 = vpop.permute.xlu0 %1163
    %1165 = vrot.lane.b32.xlu0 %v369, 12
    %v1166 = vpop.permute.xlu0 %1165
    %1167 = vrot.lane.b32.xlu0 %v272, 12
    %v1168 = vpop.permute.xlu0 %1167
    %1169 = vrot.lane.b32.xlu0 %v370, 12
    %v1170 = vpop.permute.xlu0 %1169
    %1171 = vrot.lane.b32.xlu0 %v274, 12
    %v1172 = vpop.permute.xlu0 %1171
    %1237 = vrot.lane.b32.xlu0 %v410, 16
    %v1238 = vpop.permute.xlu0 %1237
    %1239 = vrot.lane.b32.xlu0 %v411, 16
    %v1240 = vpop.permute.xlu0 %1239
    %1241 = vrot.lane.b32.xlu0 %v414, 16
    %v1242 = vpop.permute.xlu0 %1241
    %1243 = vrot.lane.b32.xlu0 %v415, 16
    %v1244 = vpop.permute.xlu0 %1243
    %1245 = vrot.lane.b32.xlu0 %v418, 16
    %v1246 = vpop.permute.xlu0 %1245
    %1247 = vrot.lane.b32.xlu0 %v419, 16
    %v1248 = vpop.permute.xlu0 %1247
    %1249 = vrot.lane.b32.xlu0 %v422, 16
    %v1250 = vpop.permute.xlu0 %1249
    %1251 = vrot.lane.b32.xlu0 %v423, 16
    %v1252 = vpop.permute.xlu0 %1251
    %1253 = vrot.lane.b32.xlu0 %v426, 16
    %v1254 = vpop.permute.xlu0 %1253
    %1255 = vrot.lane.b32.xlu0 %v427, 16
    %v1256 = vpop.permute.xlu0 %1255
    %1257 = vrot.lane.b32.xlu0 %v430, 16
    %v1258 = vpop.permute.xlu0 %1257
    %1259 = vrot.lane.b32.xlu0 %v431, 16
    %v1260 = vpop.permute.xlu0 %1259
    %1261 = vrot.lane.b32.xlu0 %v434, 16
    %v1262 = vpop.permute.xlu0 %1261
    %1263 = vrot.lane.b32.xlu0 %v435, 16
    %v1264 = vpop.permute.xlu0 %1263
    %1265 = vrot.lane.b32.xlu0 %v438, 16
    %v1266 = vpop.permute.xlu0 %1265
    %1267 = vrot.lane.b32.xlu0 %v439, 16
    %v1268 = vpop.permute.xlu0 %1267
    %1269 = vrot.lane.b32.xlu0 %v442, 16
    %v1270 = vpop.permute.xlu0 %1269
    %1271 = vrot.lane.b32.xlu0 %v443, 16
    %v1272 = vpop.permute.xlu0 %1271
    %1273 = vrot.lane.b32.xlu0 %v446, 16
    %v1274 = vpop.permute.xlu0 %1273
    %1275 = vrot.lane.b32.xlu0 %v447, 16
    %v1276 = vpop.permute.xlu0 %1275
    %1277 = vrot.lane.b32.xlu0 %v450, 16
    %v1278 = vpop.permute.xlu0 %1277
    %1279 = vrot.lane.b32.xlu0 %v451, 16
    %v1280 = vpop.permute.xlu0 %1279
    %1281 = vrot.lane.b32.xlu0 %v454, 16
    %v1282 = vpop.permute.xlu0 %1281
    %1283 = vrot.lane.b32.xlu0 %v455, 16
    %v1284 = vpop.permute.xlu0 %1283
    %1285 = vrot.lane.b32.xlu0 %v458, 16
    %v1286 = vpop.permute.xlu0 %1285
    %1287 = vrot.lane.b32.xlu0 %v459, 16
    %v1288 = vpop.permute.xlu0 %1287
    %1289 = vrot.lane.b32.xlu0 %v462, 16
    %v1290 = vpop.permute.xlu0 %1289
    %1291 = vrot.lane.b32.xlu0 %v463, 16
    %v1292 = vpop.permute.xlu0 %1291
    %1293 = vrot.lane.b32.xlu0 %v466, 16
    %v1294 = vpop.permute.xlu0 %1293
    %1295 = vrot.lane.b32.xlu0 %v467, 16
    %v1296 = vpop.permute.xlu0 %1295
    %1297 = vrot.lane.b32.xlu0 %v406, 16
    %v1298 = vpop.permute.xlu0 %1297
    %1299 = vrot.lane.b32.xlu0 %v407, 16
    %v1300 = vpop.permute.xlu0 %1299
    %1301 = vrot.lane.b32.xlu0 %v474, 16
    %v1302 = vpop.permute.xlu0 %1301
    %1303 = vrot.lane.b32.xlu0 %v475, 16
    %v1304 = vpop.permute.xlu0 %1303
    %1305 = vrot.lane.b32.xlu0 %v478, 16
    %v1306 = vpop.permute.xlu0 %1305
    %1307 = vrot.lane.b32.xlu0 %v479, 16
    %v1308 = vpop.permute.xlu0 %1307
    %1309 = vrot.lane.b32.xlu0 %v482, 16
    %v1310 = vpop.permute.xlu0 %1309
    %1311 = vrot.lane.b32.xlu0 %v483, 16
    %v1312 = vpop.permute.xlu0 %1311
    %1313 = vrot.lane.b32.xlu0 %v486, 16
    %v1314 = vpop.permute.xlu0 %1313
    %1315 = vrot.lane.b32.xlu0 %v487, 16
    %v1316 = vpop.permute.xlu0 %1315
    %1317 = vrot.lane.b32.xlu0 %v490, 16
    %v1318 = vpop.permute.xlu0 %1317
    %1319 = vrot.lane.b32.xlu0 %v491, 16
    %v1320 = vpop.permute.xlu0 %1319
    %1321 = vrot.lane.b32.xlu0 %v494, 16
    %v1322 = vpop.permute.xlu0 %1321
    %1323 = vrot.lane.b32.xlu0 %v495, 16
    %v1324 = vpop.permute.xlu0 %1323
    %1325 = vrot.lane.b32.xlu0 %v498, 16
    %v1326 = vpop.permute.xlu0 %1325
    %1327 = vrot.lane.b32.xlu0 %v499, 16
    %v1328 = vpop.permute.xlu0 %1327
    %1329 = vrot.lane.b32.xlu0 %v502, 16
    %v1330 = vpop.permute.xlu0 %1329
    %1331 = vrot.lane.b32.xlu0 %v503, 16
    %v1332 = vpop.permute.xlu0 %1331
    %1333 = vrot.lane.b32.xlu0 %v506, 16
    %v1334 = vpop.permute.xlu0 %1333
    %1335 = vrot.lane.b32.xlu0 %v507, 16
    %v1336 = vpop.permute.xlu0 %1335
    %1337 = vrot.lane.b32.xlu0 %v510, 16
    %v1338 = vpop.permute.xlu0 %1337
    %1339 = vrot.lane.b32.xlu0 %v511, 16
    %v1340 = vpop.permute.xlu0 %1339
    %1341 = vrot.lane.b32.xlu0 %v514, 16
    %v1342 = vpop.permute.xlu0 %1341
    %1343 = vrot.lane.b32.xlu0 %v515, 16
    %v1344 = vpop.permute.xlu0 %1343
    %1345 = vrot.lane.b32.xlu0 %v518, 16
    %v1346 = vpop.permute.xlu0 %1345
    %1347 = vrot.lane.b32.xlu0 %v519, 16
    %v1348 = vpop.permute.xlu0 %1347
    %1349 = vrot.lane.b32.xlu0 %v522, 16
    %v1350 = vpop.permute.xlu0 %1349
    %1351 = vrot.lane.b32.xlu0 %v523, 16
    %v1352 = vpop.permute.xlu0 %1351
    %1353 = vrot.lane.b32.xlu0 %v526, 16
    %v1354 = vpop.permute.xlu0 %1353
    %1355 = vrot.lane.b32.xlu0 %v527, 16
    %v1356 = vpop.permute.xlu0 %1355
    %1357 = vrot.lane.b32.xlu0 %v530, 16
    %v1358 = vpop.permute.xlu0 %1357
    %1359 = vrot.lane.b32.xlu0 %v531, 16
    %v1360 = vpop.permute.xlu0 %1359
    %1361 = vrot.lane.b32.xlu0 %v470, 16
    %v1362 = vpop.permute.xlu0 %1361
    %1363 = vrot.lane.b32.xlu0 %v471, 16
    %v1364 = vpop.permute.xlu0 %1363
    %1429 = vrot.lane.b32.xlu0 %v731, 20
    %v1430 = vpop.permute.xlu0 %1429
    %1431 = vrot.lane.b32.xlu0 %v732, 20
    %v1432 = vpop.permute.xlu0 %1431
    %1433 = vrot.lane.b32.xlu0 %v735, 20
    %v1434 = vpop.permute.xlu0 %1433
    %1435 = vrot.lane.b32.xlu0 %v736, 20
    %v1436 = vpop.permute.xlu0 %1435
    %1437 = vrot.lane.b32.xlu0 %v739, 20
    %v1438 = vpop.permute.xlu0 %1437
    %1439 = vrot.lane.b32.xlu0 %v740, 20
    %v1440 = vpop.permute.xlu0 %1439
    %1441 = vrot.lane.b32.xlu0 %v743, 20
    %v1442 = vpop.permute.xlu0 %1441
    %1443 = vrot.lane.b32.xlu0 %v744, 20
    %v1444 = vpop.permute.xlu0 %1443
    %1445 = vrot.lane.b32.xlu0 %v747, 20
    %v1446 = vpop.permute.xlu0 %1445
    %1447 = vrot.lane.b32.xlu0 %v748, 20
    %v1448 = vpop.permute.xlu0 %1447
    %1449 = vrot.lane.b32.xlu0 %v751, 20
    %v1450 = vpop.permute.xlu0 %1449
    %1451 = vrot.lane.b32.xlu0 %v752, 20
    %v1452 = vpop.permute.xlu0 %1451
    %1453 = vrot.lane.b32.xlu0 %v755, 20
    %v1454 = vpop.permute.xlu0 %1453
    %1455 = vrot.lane.b32.xlu0 %v756, 20
    %v1456 = vpop.permute.xlu0 %1455
    %1457 = vrot.lane.b32.xlu0 %v759, 20
    %v1458 = vpop.permute.xlu0 %1457
    %1459 = vrot.lane.b32.xlu0 %v760, 20
    %v1460 = vpop.permute.xlu0 %1459
    %1461 = vrot.lane.b32.xlu0 %v763, 20
    %v1462 = vpop.permute.xlu0 %1461
    %1463 = vrot.lane.b32.xlu0 %v764, 20
    %v1464 = vpop.permute.xlu0 %1463
    %1465 = vrot.lane.b32.xlu0 %v767, 20
    %v1466 = vpop.permute.xlu0 %1465
    %1467 = vrot.lane.b32.xlu0 %v768, 20
    %v1468 = vpop.permute.xlu0 %1467
    %1469 = vrot.lane.b32.xlu0 %v771, 20
    %v1470 = vpop.permute.xlu0 %1469
    %1471 = vrot.lane.b32.xlu0 %v772, 20
    %v1472 = vpop.permute.xlu0 %1471
    %1473 = vrot.lane.b32.xlu0 %v775, 20
    %v1474 = vpop.permute.xlu0 %1473
    %1475 = vrot.lane.b32.xlu0 %v776, 20
    %v1476 = vpop.permute.xlu0 %1475
    %1477 = vrot.lane.b32.xlu0 %v779, 20
    %v1478 = vpop.permute.xlu0 %1477
    %1479 = vrot.lane.b32.xlu0 %v780, 20
    %v1480 = vpop.permute.xlu0 %1479
    %1481 = vrot.lane.b32.xlu0 %v783, 20
    %v1482 = vpop.permute.xlu0 %1481
    %1483 = vrot.lane.b32.xlu0 %v784, 20
    %v1484 = vpop.permute.xlu0 %1483
    %1485 = vrot.lane.b32.xlu0 %v787, 20
    %v1486 = vpop.permute.xlu0 %1485
    %1487 = vrot.lane.b32.xlu0 %v788, 20
    %v1488 = vpop.permute.xlu0 %1487
    %1489 = vrot.lane.b32.xlu0 %v727, 20
    %v1490 = vpop.permute.xlu0 %1489
    %1491 = vrot.lane.b32.xlu0 %v728, 20
    %v1492 = vpop.permute.xlu0 %1491
    %1493 = vrot.lane.b32.xlu0 %v795, 20
    %v1494 = vpop.permute.xlu0 %1493
    %1495 = vrot.lane.b32.xlu0 %v796, 20
    %v1496 = vpop.permute.xlu0 %1495
    %1497 = vrot.lane.b32.xlu0 %v799, 20
    %v1498 = vpop.permute.xlu0 %1497
    %1499 = vrot.lane.b32.xlu0 %v800, 20
    %v1500 = vpop.permute.xlu0 %1499
    %1501 = vrot.lane.b32.xlu0 %v803, 20
    %v1502 = vpop.permute.xlu0 %1501
    %1503 = vrot.lane.b32.xlu0 %v804, 20
    %v1504 = vpop.permute.xlu0 %1503
    %1505 = vrot.lane.b32.xlu0 %v807, 20
    %v1506 = vpop.permute.xlu0 %1505
    %1507 = vrot.lane.b32.xlu0 %v808, 20
    %v1508 = vpop.permute.xlu0 %1507
    %1509 = vrot.lane.b32.xlu0 %v811, 20
    %v1510 = vpop.permute.xlu0 %1509
    %1511 = vrot.lane.b32.xlu0 %v812, 20
    %v1512 = vpop.permute.xlu0 %1511
    %1513 = vrot.lane.b32.xlu0 %v815, 20
    %v1514 = vpop.permute.xlu0 %1513
    %1515 = vrot.lane.b32.xlu0 %v816, 20
    %v1516 = vpop.permute.xlu0 %1515
    %1517 = vrot.lane.b32.xlu0 %v819, 20
    %v1518 = vpop.permute.xlu0 %1517
    %1519 = vrot.lane.b32.xlu0 %v820, 20
    %v1520 = vpop.permute.xlu0 %1519
    %1521 = vrot.lane.b32.xlu0 %v823, 20
    %v1522 = vpop.permute.xlu0 %1521
    %1523 = vrot.lane.b32.xlu0 %v824, 20
    %v1524 = vpop.permute.xlu0 %1523
    %1525 = vrot.lane.b32.xlu0 %v827, 20
    %v1526 = vpop.permute.xlu0 %1525
    %1527 = vrot.lane.b32.xlu0 %v828, 20
    %v1528 = vpop.permute.xlu0 %1527
    %1529 = vrot.lane.b32.xlu0 %v831, 20
    %v1530 = vpop.permute.xlu0 %1529
    %1531 = vrot.lane.b32.xlu0 %v832, 20
    %v1532 = vpop.permute.xlu0 %1531
    %1533 = vrot.lane.b32.xlu0 %v835, 20
    %v1534 = vpop.permute.xlu0 %1533
    %1535 = vrot.lane.b32.xlu0 %v836, 20
    %v1536 = vpop.permute.xlu0 %1535
    %1537 = vrot.lane.b32.xlu0 %v839, 20
    %v1538 = vpop.permute.xlu0 %1537
    %1539 = vrot.lane.b32.xlu0 %v840, 20
    %v1540 = vpop.permute.xlu0 %1539
    %1541 = vrot.lane.b32.xlu0 %v843, 20
    %v1542 = vpop.permute.xlu0 %1541
    %1543 = vrot.lane.b32.xlu0 %v844, 20
    %v1544 = vpop.permute.xlu0 %1543
    %1545 = vrot.lane.b32.xlu0 %v847, 20
    %v1546 = vpop.permute.xlu0 %1545
    %1547 = vrot.lane.b32.xlu0 %v848, 20
    %v1548 = vpop.permute.xlu0 %1547
    %1549 = vrot.lane.b32.xlu0 %v851, 20
    %v1550 = vpop.permute.xlu0 %1549
    %1551 = vrot.lane.b32.xlu0 %v852, 20
    %v1552 = vpop.permute.xlu0 %1551
    %1553 = vrot.lane.b32.xlu0 %v791, 20
    %v1554 = vpop.permute.xlu0 %1553
    %1555 = vrot.lane.b32.xlu0 %v792, 20
    %v1556 = vpop.permute.xlu0 %1555
    %1621 = vrot.lane.b32.xlu0 %v340, 24
    %v1622 = vpop.permute.xlu0 %1621
    %1623 = vrot.lane.b32.xlu0 %v214, 24
    %v1624 = vpop.permute.xlu0 %1623
    %1625 = vrot.lane.b32.xlu0 %v341, 24
    %v1626 = vpop.permute.xlu0 %1625
    %1627 = vrot.lane.b32.xlu0 %v216, 24
    %v1628 = vpop.permute.xlu0 %1627
    %1629 = vrot.lane.b32.xlu0 %v342, 24
    %v1630 = vpop.permute.xlu0 %1629
    %1631 = vrot.lane.b32.xlu0 %v218, 24
    %v1632 = vpop.permute.xlu0 %1631
    %1633 = vrot.lane.b32.xlu0 %v343, 24
    %v1634 = vpop.permute.xlu0 %1633
    %1635 = vrot.lane.b32.xlu0 %v220, 24
    %v1636 = vpop.permute.xlu0 %1635
    %1637 = vrot.lane.b32.xlu0 %v344, 24
    %v1638 = vpop.permute.xlu0 %1637
    %1639 = vrot.lane.b32.xlu0 %v222, 24
    %v1640 = vpop.permute.xlu0 %1639
    %1641 = vrot.lane.b32.xlu0 %v345, 24
    %v1642 = vpop.permute.xlu0 %1641
    %1643 = vrot.lane.b32.xlu0 %v224, 24
    %v1644 = vpop.permute.xlu0 %1643
    %1645 = vrot.lane.b32.xlu0 %v346, 24
    %v1646 = vpop.permute.xlu0 %1645
    %1647 = vrot.lane.b32.xlu0 %v226, 24
    %v1648 = vpop.permute.xlu0 %1647
    %1649 = vrot.lane.b32.xlu0 %v347, 24
    %v1650 = vpop.permute.xlu0 %1649
    %1651 = vrot.lane.b32.xlu0 %v228, 24
    %v1652 = vpop.permute.xlu0 %1651
    %1653 = vrot.lane.b32.xlu0 %v348, 24
    %v1654 = vpop.permute.xlu0 %1653
    %1655 = vrot.lane.b32.xlu0 %v230, 24
    %v1656 = vpop.permute.xlu0 %1655
    %1657 = vrot.lane.b32.xlu0 %v349, 24
    %v1658 = vpop.permute.xlu0 %1657
    %1659 = vrot.lane.b32.xlu0 %v232, 24
    %v1660 = vpop.permute.xlu0 %1659
    %1661 = vrot.lane.b32.xlu0 %v350, 24
    %v1662 = vpop.permute.xlu0 %1661
    %1663 = vrot.lane.b32.xlu0 %v234, 24
    %v1664 = vpop.permute.xlu0 %1663
    %1665 = vrot.lane.b32.xlu0 %v351, 24
    %v1666 = vpop.permute.xlu0 %1665
    %1667 = vrot.lane.b32.xlu0 %v236, 24
    %v1668 = vpop.permute.xlu0 %1667
    %1669 = vrot.lane.b32.xlu0 %v352, 24
    %v1670 = vpop.permute.xlu0 %1669
    %1671 = vrot.lane.b32.xlu0 %v238, 24
    %v1672 = vpop.permute.xlu0 %1671
    %1673 = vrot.lane.b32.xlu0 %v353, 24
    %v1674 = vpop.permute.xlu0 %1673
    %1675 = vrot.lane.b32.xlu0 %v240, 24
    %v1676 = vpop.permute.xlu0 %1675
    %1677 = vrot.lane.b32.xlu0 %v354, 24
    %v1678 = vpop.permute.xlu0 %1677
    %1679 = vrot.lane.b32.xlu0 %v242, 24
    %v1680 = vpop.permute.xlu0 %1679
    %1681 = vrot.lane.b32.xlu0 %v339, 24
    %v1682 = vpop.permute.xlu0 %1681
    %1683 = vrot.lane.b32.xlu0 %v212, 24
    %v1684 = vpop.permute.xlu0 %1683
    %1685 = vrot.lane.b32.xlu0 %v356, 24
    %v1686 = vpop.permute.xlu0 %1685
    %1687 = vrot.lane.b32.xlu0 %v246, 24
    %v1688 = vpop.permute.xlu0 %1687
    %1689 = vrot.lane.b32.xlu0 %v357, 24
    %v1690 = vpop.permute.xlu0 %1689
    %1691 = vrot.lane.b32.xlu0 %v248, 24
    %v1692 = vpop.permute.xlu0 %1691
    %1693 = vrot.lane.b32.xlu0 %v358, 24
    %v1694 = vpop.permute.xlu0 %1693
    %1695 = vrot.lane.b32.xlu0 %v250, 24
    %v1696 = vpop.permute.xlu0 %1695
    %1697 = vrot.lane.b32.xlu0 %v359, 24
    %v1698 = vpop.permute.xlu0 %1697
    %1699 = vrot.lane.b32.xlu0 %v252, 24
    %v1700 = vpop.permute.xlu0 %1699
    %1701 = vrot.lane.b32.xlu0 %v360, 24
    %v1702 = vpop.permute.xlu0 %1701
    %1703 = vrot.lane.b32.xlu0 %v254, 24
    %v1704 = vpop.permute.xlu0 %1703
    %1705 = vrot.lane.b32.xlu0 %v361, 24
    %v1706 = vpop.permute.xlu0 %1705
    %1707 = vrot.lane.b32.xlu0 %v256, 24
    %v1708 = vpop.permute.xlu0 %1707
    %1709 = vrot.lane.b32.xlu0 %v362, 24
    %v1710 = vpop.permute.xlu0 %1709
    %1711 = vrot.lane.b32.xlu0 %v258, 24
    %v1712 = vpop.permute.xlu0 %1711
    %1713 = vrot.lane.b32.xlu0 %v363, 24
    %v1714 = vpop.permute.xlu0 %1713
    %1715 = vrot.lane.b32.xlu0 %v260, 24
    %v1716 = vpop.permute.xlu0 %1715
    %1717 = vrot.lane.b32.xlu0 %v364, 24
    %v1718 = vpop.permute.xlu0 %1717
    %1719 = vrot.lane.b32.xlu0 %v262, 24
    %v1720 = vpop.permute.xlu0 %1719
    %1721 = vrot.lane.b32.xlu0 %v365, 24
    %v1722 = vpop.permute.xlu0 %1721
    %1723 = vrot.lane.b32.xlu0 %v264, 24
    %v1724 = vpop.permute.xlu0 %1723
    %1725 = vrot.lane.b32.xlu0 %v366, 24
    %v1726 = vpop.permute.xlu0 %1725
    %1727 = vrot.lane.b32.xlu0 %v266, 24
    %v1728 = vpop.permute.xlu0 %1727
    %1729 = vrot.lane.b32.xlu0 %v367, 24
    %v1730 = vpop.permute.xlu0 %1729
    %1731 = vrot.lane.b32.xlu0 %v268, 24
    %v1732 = vpop.permute.xlu0 %1731
    %1733 = vrot.lane.b32.xlu0 %v368, 24
    %v1734 = vpop.permute.xlu0 %1733
    %1735 = vrot.lane.b32.xlu0 %v270, 24
    %v1736 = vpop.permute.xlu0 %1735
    %1737 = vrot.lane.b32.xlu0 %v369, 24
    %v1738 = vpop.permute.xlu0 %1737
    %1739 = vrot.lane.b32.xlu0 %v272, 24
    %v1740 = vpop.permute.xlu0 %1739
    %1741 = vrot.lane.b32.xlu0 %v370, 24
    %v1742 = vpop.permute.xlu0 %1741
    %1743 = vrot.lane.b32.xlu0 %v274, 24
    %v1744 = vpop.permute.xlu0 %1743
    %1745 = vrot.lane.b32.xlu0 %v355, 24
    %v1746 = vpop.permute.xlu0 %1745
    %1747 = vrot.lane.b32.xlu0 %v244, 24
    %v1748 = vpop.permute.xlu0 %1747
    %1813 = vrot.lane.b32.xlu0 %v414, 28
    %v1814 = vpop.permute.xlu0 %1813
    %1815 = vrot.lane.b32.xlu0 %v415, 28
    %v1816 = vpop.permute.xlu0 %1815
    %1817 = vrot.lane.b32.xlu0 %v418, 28
    %v1818 = vpop.permute.xlu0 %1817
    %1819 = vrot.lane.b32.xlu0 %v419, 28
    %v1820 = vpop.permute.xlu0 %1819
    %1821 = vrot.lane.b32.xlu0 %v422, 28
    %v1822 = vpop.permute.xlu0 %1821
    %1823 = vrot.lane.b32.xlu0 %v423, 28
    %v1824 = vpop.permute.xlu0 %1823
    %1825 = vrot.lane.b32.xlu0 %v426, 28
    %v1826 = vpop.permute.xlu0 %1825
    %1827 = vrot.lane.b32.xlu0 %v427, 28
    %v1828 = vpop.permute.xlu0 %1827
    %1829 = vrot.lane.b32.xlu0 %v430, 28
    %v1830 = vpop.permute.xlu0 %1829
    %1831 = vrot.lane.b32.xlu0 %v431, 28
    %v1832 = vpop.permute.xlu0 %1831
    %1833 = vrot.lane.b32.xlu0 %v434, 28
    %v1834 = vpop.permute.xlu0 %1833
    %1835 = vrot.lane.b32.xlu0 %v435, 28
    %v1836 = vpop.permute.xlu0 %1835
    %1837 = vrot.lane.b32.xlu0 %v438, 28
    %v1838 = vpop.permute.xlu0 %1837
    %1839 = vrot.lane.b32.xlu0 %v439, 28
    %v1840 = vpop.permute.xlu0 %1839
    %1841 = vrot.lane.b32.xlu0 %v442, 28
    %v1842 = vpop.permute.xlu0 %1841
    %1843 = vrot.lane.b32.xlu0 %v443, 28
    %v1844 = vpop.permute.xlu0 %1843
    %1845 = vrot.lane.b32.xlu0 %v446, 28
    %v1846 = vpop.permute.xlu0 %1845
    %1847 = vrot.lane.b32.xlu0 %v447, 28
    %v1848 = vpop.permute.xlu0 %1847
    %1849 = vrot.lane.b32.xlu0 %v450, 28
    %v1850 = vpop.permute.xlu0 %1849
    %1851 = vrot.lane.b32.xlu0 %v451, 28
    %v1852 = vpop.permute.xlu0 %1851
    %1853 = vrot.lane.b32.xlu0 %v454, 28
    %v1854 = vpop.permute.xlu0 %1853
    %1855 = vrot.lane.b32.xlu0 %v455, 28
    %v1856 = vpop.permute.xlu0 %1855
    %1857 = vrot.lane.b32.xlu0 %v458, 28
    %v1858 = vpop.permute.xlu0 %1857
    %1859 = vrot.lane.b32.xlu0 %v459, 28
    %v1860 = vpop.permute.xlu0 %1859
    %1861 = vrot.lane.b32.xlu0 %v462, 28
    %v1862 = vpop.permute.xlu0 %1861
    %1863 = vrot.lane.b32.xlu0 %v463, 28
    %v1864 = vpop.permute.xlu0 %1863
    %1865 = vrot.lane.b32.xlu0 %v466, 28
    %v1866 = vpop.permute.xlu0 %1865
    %1867 = vrot.lane.b32.xlu0 %v467, 28
    %v1868 = vpop.permute.xlu0 %1867
    %1869 = vrot.lane.b32.xlu0 %v406, 28
    %v1870 = vpop.permute.xlu0 %1869
    %1871 = vrot.lane.b32.xlu0 %v407, 28
    %v1872 = vpop.permute.xlu0 %1871
    %1873 = vrot.lane.b32.xlu0 %v410, 28
    %v1874 = vpop.permute.xlu0 %1873
    %1875 = vrot.lane.b32.xlu0 %v411, 28
    %v1876 = vpop.permute.xlu0 %1875
    %1877 = vrot.lane.b32.xlu0 %v478, 28
    %v1878 = vpop.permute.xlu0 %1877
    %1879 = vrot.lane.b32.xlu0 %v479, 28
    %v1880 = vpop.permute.xlu0 %1879
    %1881 = vrot.lane.b32.xlu0 %v482, 28
    %v1882 = vpop.permute.xlu0 %1881
    %1883 = vrot.lane.b32.xlu0 %v483, 28
    %v1884 = vpop.permute.xlu0 %1883
    %1885 = vrot.lane.b32.xlu0 %v486, 28
    %v1886 = vpop.permute.xlu0 %1885
    %1887 = vrot.lane.b32.xlu0 %v487, 28
    %v1888 = vpop.permute.xlu0 %1887
    %1889 = vrot.lane.b32.xlu0 %v490, 28
    %v1890 = vpop.permute.xlu0 %1889
    %1891 = vrot.lane.b32.xlu0 %v491, 28
    %v1892 = vpop.permute.xlu0 %1891
    %1893 = vrot.lane.b32.xlu0 %v494, 28
    %v1894 = vpop.permute.xlu0 %1893
    %1895 = vrot.lane.b32.xlu0 %v495, 28
    %v1896 = vpop.permute.xlu0 %1895
    %1897 = vrot.lane.b32.xlu0 %v498, 28
    %v1898 = vpop.permute.xlu0 %1897
    %1899 = vrot.lane.b32.xlu0 %v499, 28
    %v1900 = vpop.permute.xlu0 %1899
    %1901 = vrot.lane.b32.xlu0 %v502, 28
    %v1902 = vpop.permute.xlu0 %1901
    %1903 = vrot.lane.b32.xlu0 %v503, 28
    %v1904 = vpop.permute.xlu0 %1903
    %1905 = vrot.lane.b32.xlu0 %v506, 28
    %v1906 = vpop.permute.xlu0 %1905
    %1907 = vrot.lane.b32.xlu0 %v507, 28
    %v1908 = vpop.permute.xlu0 %1907
    %1909 = vrot.lane.b32.xlu0 %v510, 28
    %v1910 = vpop.permute.xlu0 %1909
    %1911 = vrot.lane.b32.xlu0 %v511, 28
    %v1912 = vpop.permute.xlu0 %1911
    %1913 = vrot.lane.b32.xlu0 %v514, 28
    %v1914 = vpop.permute.xlu0 %1913
    %1915 = vrot.lane.b32.xlu0 %v515, 28
    %v1916 = vpop.permute.xlu0 %1915
    %1917 = vrot.lane.b32.xlu0 %v518, 28
    %v1918 = vpop.permute.xlu0 %1917
    %1919 = vrot.lane.b32.xlu0 %v519, 28
    %v1920 = vpop.permute.xlu0 %1919
    %1921 = vrot.lane.b32.xlu0 %v522, 28
    %v1922 = vpop.permute.xlu0 %1921
    %1923 = vrot.lane.b32.xlu0 %v523, 28
    %v1924 = vpop.permute.xlu0 %1923
    %1925 = vrot.lane.b32.xlu0 %v526, 28
    %v1926 = vpop.permute.xlu0 %1925
    %1927 = vrot.lane.b32.xlu0 %v527, 28
    %v1928 = vpop.permute.xlu0 %1927
    %1929 = vrot.lane.b32.xlu0 %v530, 28
    %v1930 = vpop.permute.xlu0 %1929
    %1931 = vrot.lane.b32.xlu0 %v531, 28
    %v1932 = vpop.permute.xlu0 %1931
    %1933 = vrot.lane.b32.xlu0 %v470, 28
    %v1934 = vpop.permute.xlu0 %1933
    %1935 = vrot.lane.b32.xlu0 %v471, 28
    %v1936 = vpop.permute.xlu0 %1935
    %1937 = vrot.lane.b32.xlu0 %v474, 28
    %v1938 = vpop.permute.xlu0 %1937
    %1939 = vrot.lane.b32.xlu0 %v475, 28
    %v1940 = vpop.permute.xlu0 %1939
    %2005 = vrot.lane.b32.xlu0 %v735, 32
    %v2006 = vpop.permute.xlu0 %2005
    %2007 = vrot.lane.b32.xlu0 %v736, 32
    %v2008 = vpop.permute.xlu0 %2007
    %2009 = vrot.lane.b32.xlu0 %v739, 32
    %v2010 = vpop.permute.xlu0 %2009
    %2011 = vrot.lane.b32.xlu0 %v740, 32
    %v2012 = vpop.permute.xlu0 %2011
    %2013 = vrot.lane.b32.xlu0 %v743, 32
    %v2014 = vpop.permute.xlu0 %2013
    %2015 = vrot.lane.b32.xlu0 %v744, 32
    %v2016 = vpop.permute.xlu0 %2015
    %2017 = vrot.lane.b32.xlu0 %v747, 32
    %v2018 = vpop.permute.xlu0 %2017
    %2019 = vrot.lane.b32.xlu0 %v748, 32
    %v2020 = vpop.permute.xlu0 %2019
    %2021 = vrot.lane.b32.xlu0 %v751, 32
    %v2022 = vpop.permute.xlu0 %2021
    %2023 = vrot.lane.b32.xlu0 %v752, 32
    %v2024 = vpop.permute.xlu0 %2023
    %2025 = vrot.lane.b32.xlu0 %v755, 32
    %v2026 = vpop.permute.xlu0 %2025
    %2027 = vrot.lane.b32.xlu0 %v756, 32
    %v2028 = vpop.permute.xlu0 %2027
    %2029 = vrot.lane.b32.xlu0 %v759, 32
    %v2030 = vpop.permute.xlu0 %2029
    %2031 = vrot.lane.b32.xlu0 %v760, 32
    %v2032 = vpop.permute.xlu0 %2031
    %2033 = vrot.lane.b32.xlu0 %v763, 32
    %v2034 = vpop.permute.xlu0 %2033
    %2035 = vrot.lane.b32.xlu0 %v764, 32
    %v2036 = vpop.permute.xlu0 %2035
    %2037 = vrot.lane.b32.xlu0 %v767, 32
    %v2038 = vpop.permute.xlu0 %2037
    %2039 = vrot.lane.b32.xlu0 %v768, 32
    %v2040 = vpop.permute.xlu0 %2039
    %2041 = vrot.lane.b32.xlu0 %v771, 32
    %v2042 = vpop.permute.xlu0 %2041
    %2043 = vrot.lane.b32.xlu0 %v772, 32
    %v2044 = vpop.permute.xlu0 %2043
    %2045 = vrot.lane.b32.xlu0 %v775, 32
    %v2046 = vpop.permute.xlu0 %2045
    %2047 = vrot.lane.b32.xlu0 %v776, 32
    %v2048 = vpop.permute.xlu0 %2047
    %2049 = vrot.lane.b32.xlu0 %v779, 32
    %v2050 = vpop.permute.xlu0 %2049
    %2051 = vrot.lane.b32.xlu0 %v780, 32
    %v2052 = vpop.permute.xlu0 %2051
    %2053 = vrot.lane.b32.xlu0 %v783, 32
    %v2054 = vpop.permute.xlu0 %2053
    %2055 = vrot.lane.b32.xlu0 %v784, 32
    %v2056 = vpop.permute.xlu0 %2055
    %2057 = vrot.lane.b32.xlu0 %v787, 32
    %v2058 = vpop.permute.xlu0 %2057
    %2059 = vrot.lane.b32.xlu0 %v788, 32
    %v2060 = vpop.permute.xlu0 %2059
    %2061 = vrot.lane.b32.xlu0 %v727, 32
    %v2062 = vpop.permute.xlu0 %2061
    %2063 = vrot.lane.b32.xlu0 %v728, 32
    %v2064 = vpop.permute.xlu0 %2063
    %2065 = vrot.lane.b32.xlu0 %v731, 32
    %v2066 = vpop.permute.xlu0 %2065
    %2067 = vrot.lane.b32.xlu0 %v732, 32
    %v2068 = vpop.permute.xlu0 %2067
    %2069 = vrot.lane.b32.xlu0 %v799, 32
    %v2070 = vpop.permute.xlu0 %2069
    %2071 = vrot.lane.b32.xlu0 %v800, 32
    %v2072 = vpop.permute.xlu0 %2071
    %2073 = vrot.lane.b32.xlu0 %v803, 32
    %v2074 = vpop.permute.xlu0 %2073
    %2075 = vrot.lane.b32.xlu0 %v804, 32
    %v2076 = vpop.permute.xlu0 %2075
    %2077 = vrot.lane.b32.xlu0 %v807, 32
    %v2078 = vpop.permute.xlu0 %2077
    %2079 = vrot.lane.b32.xlu0 %v808, 32
    %v2080 = vpop.permute.xlu0 %2079
    %2081 = vrot.lane.b32.xlu0 %v811, 32
    %v2082 = vpop.permute.xlu0 %2081
    %2083 = vrot.lane.b32.xlu0 %v812, 32
    %v2084 = vpop.permute.xlu0 %2083
    %2085 = vrot.lane.b32.xlu0 %v815, 32
    %v2086 = vpop.permute.xlu0 %2085
    %2087 = vrot.lane.b32.xlu0 %v816, 32
    %v2088 = vpop.permute.xlu0 %2087
    %2089 = vrot.lane.b32.xlu0 %v819, 32
    %v2090 = vpop.permute.xlu0 %2089
    %2091 = vrot.lane.b32.xlu0 %v820, 32
    %v2092 = vpop.permute.xlu0 %2091
    %2093 = vrot.lane.b32.xlu0 %v823, 32
    %v2094 = vpop.permute.xlu0 %2093
    %2095 = vrot.lane.b32.xlu0 %v824, 32
    %v2096 = vpop.permute.xlu0 %2095
    %2097 = vrot.lane.b32.xlu0 %v827, 32
    %v2098 = vpop.permute.xlu0 %2097
    %2099 = vrot.lane.b32.xlu0 %v828, 32
    %v2100 = vpop.permute.xlu0 %2099
    %2101 = vrot.lane.b32.xlu0 %v831, 32
    %v2102 = vpop.permute.xlu0 %2101
    %2103 = vrot.lane.b32.xlu0 %v832, 32
    %v2104 = vpop.permute.xlu0 %2103
    %2105 = vrot.lane.b32.xlu0 %v835, 32
    %v2106 = vpop.permute.xlu0 %2105
    %2107 = vrot.lane.b32.xlu0 %v836, 32
    %v2108 = vpop.permute.xlu0 %2107
    %2109 = vrot.lane.b32.xlu0 %v839, 32
    %v2110 = vpop.permute.xlu0 %2109
    %2111 = vrot.lane.b32.xlu0 %v840, 32
    %v2112 = vpop.permute.xlu0 %2111
    %2113 = vrot.lane.b32.xlu0 %v843, 32
    %v2114 = vpop.permute.xlu0 %2113
    %2115 = vrot.lane.b32.xlu0 %v844, 32
    %v2116 = vpop.permute.xlu0 %2115
    %2117 = vrot.lane.b32.xlu0 %v847, 32
    %v2118 = vpop.permute.xlu0 %2117
    %2119 = vrot.lane.b32.xlu0 %v848, 32
    %v2120 = vpop.permute.xlu0 %2119
    %2121 = vrot.lane.b32.xlu0 %v851, 32
    %v2122 = vpop.permute.xlu0 %2121
    %2123 = vrot.lane.b32.xlu0 %v852, 32
    %v2124 = vpop.permute.xlu0 %2123
    %2125 = vrot.lane.b32.xlu0 %v791, 32
    %v2126 = vpop.permute.xlu0 %2125
    %2127 = vrot.lane.b32.xlu0 %v792, 32
    %v2128 = vpop.permute.xlu0 %2127
    %2129 = vrot.lane.b32.xlu0 %v795, 32
    %v2130 = vpop.permute.xlu0 %2129
    %2131 = vrot.lane.b32.xlu0 %v796, 32
    %v2132 = vpop.permute.xlu0 %2131
    %vm2197 = vcmask 31744
    %v2198 = vsel %vm2197, %v354, %v533
    %v2199 = vsel %vm2197, %v242, %v535
    %v2200 = vsel %vm2197, %v339, %v537
    %v2201 = vsel %vm2197, %v212, %v539
    %v2202 = vsel %vm2197, %v340, %v541
    %v2203 = vsel %vm2197, %v214, %v543
    %v2204 = vsel %vm2197, %v341, %v545
    %v2205 = vsel %vm2197, %v216, %v547
    %v2206 = vsel %vm2197, %v342, %v549
    %v2207 = vsel %vm2197, %v218, %v551
    %v2208 = vsel %vm2197, %v343, %v553
    %v2209 = vsel %vm2197, %v220, %v555
    %v2210 = vsel %vm2197, %v344, %v557
    %v2211 = vsel %vm2197, %v222, %v559
    %v2212 = vsel %vm2197, %v345, %v561
    %v2213 = vsel %vm2197, %v224, %v563
    %v2214 = vsel %vm2197, %v346, %v565
    %v2215 = vsel %vm2197, %v226, %v567
    %v2216 = vsel %vm2197, %v347, %v569
    %v2217 = vsel %vm2197, %v228, %v571
    %v2218 = vsel %vm2197, %v348, %v573
    %v2219 = vsel %vm2197, %v230, %v575
    %v2220 = vsel %vm2197, %v349, %v577
    %v2221 = vsel %vm2197, %v232, %v579
    %v2222 = vsel %vm2197, %v350, %v581
    %v2223 = vsel %vm2197, %v234, %v583
    %v2224 = vsel %vm2197, %v351, %v585
    %v2225 = vsel %vm2197, %v236, %v587
    %v2226 = vsel %vm2197, %v352, %v589
    %v2227 = vsel %vm2197, %v238, %v591
    %v2228 = vsel %vm2197, %v353, %v593
    %v2229 = vsel %vm2197, %v240, %v595
    %v2230 = vsel %vm2197, %v370, %v597
    %v2231 = vsel %vm2197, %v274, %v599
    %v2232 = vsel %vm2197, %v355, %v601
    %v2233 = vsel %vm2197, %v244, %v603
    %v2234 = vsel %vm2197, %v356, %v605
    %v2235 = vsel %vm2197, %v246, %v607
    %v2236 = vsel %vm2197, %v357, %v609
    %v2237 = vsel %vm2197, %v248, %v611
    %v2238 = vsel %vm2197, %v358, %v613
    %v2239 = vsel %vm2197, %v250, %v615
    %v2240 = vsel %vm2197, %v359, %v617
    %v2241 = vsel %vm2197, %v252, %v619
    %v2242 = vsel %vm2197, %v360, %v621
    %v2243 = vsel %vm2197, %v254, %v623
    %v2244 = vsel %vm2197, %v361, %v625
    %v2245 = vsel %vm2197, %v256, %v627
    %v2246 = vsel %vm2197, %v362, %v629
    %v2247 = vsel %vm2197, %v258, %v631
    %v2248 = vsel %vm2197, %v363, %v633
    %v2249 = vsel %vm2197, %v260, %v635
    %v2250 = vsel %vm2197, %v364, %v637
    %v2251 = vsel %vm2197, %v262, %v639
    %v2252 = vsel %vm2197, %v365, %v641
    %v2253 = vsel %vm2197, %v264, %v643
    %v2254 = vsel %vm2197, %v366, %v645
    %v2255 = vsel %vm2197, %v266, %v647
    %v2256 = vsel %vm2197, %v367, %v649
    %v2257 = vsel %vm2197, %v268, %v651
    %v2258 = vsel %vm2197, %v368, %v653
    %v2259 = vsel %vm2197, %v270, %v655
    %v2260 = vsel %vm2197, %v369, %v657
    %v2261 = vsel %vm2197, %v272, %v659
    %vm2262 = vcmask 64512
    %v2263 = vsel %vm2262, %v2198, %v854
    %v2264 = vsel %vm2262, %v2199, %v856
    %v2265 = vsel %vm2262, %v2200, %v858
    %v2266 = vsel %vm2262, %v2201, %v860
    %v2267 = vsel %vm2262, %v2202, %v862
    %v2268 = vsel %vm2262, %v2203, %v864
    %v2269 = vsel %vm2262, %v2204, %v866
    %v2270 = vsel %vm2262, %v2205, %v868
    %v2271 = vsel %vm2262, %v2206, %v870
    %v2272 = vsel %vm2262, %v2207, %v872
    %v2273 = vsel %vm2262, %v2208, %v874
    %v2274 = vsel %vm2262, %v2209, %v876
    %v2275 = vsel %vm2262, %v2210, %v878
    %v2276 = vsel %vm2262, %v2211, %v880
    %v2277 = vsel %vm2262, %v2212, %v882
    %v2278 = vsel %vm2262, %v2213, %v884
    %v2279 = vsel %vm2262, %v2214, %v886
    %v2280 = vsel %vm2262, %v2215, %v888
    %v2281 = vsel %vm2262, %v2216, %v890
    %v2282 = vsel %vm2262, %v2217, %v892
    %v2283 = vsel %vm2262, %v2218, %v894
    %v2284 = vsel %vm2262, %v2219, %v896
    %v2285 = vsel %vm2262, %v2220, %v898
    %v2286 = vsel %vm2262, %v2221, %v900
    %v2287 = vsel %vm2262, %v2222, %v902
    %v2288 = vsel %vm2262, %v2223, %v904
    %v2289 = vsel %vm2262, %v2224, %v906
    %v2290 = vsel %vm2262, %v2225, %v908
    %v2291 = vsel %vm2262, %v2226, %v910
    %v2292 = vsel %vm2262, %v2227, %v912
    %v2293 = vsel %vm2262, %v2228, %v914
    %v2294 = vsel %vm2262, %v2229, %v916
    %v2295 = vsel %vm2262, %v2230, %v918
    %v2296 = vsel %vm2262, %v2231, %v920
    %v2297 = vsel %vm2262, %v2232, %v922
    %v2298 = vsel %vm2262, %v2233, %v924
    %v2299 = vsel %vm2262, %v2234, %v926
    %v2300 = vsel %vm2262, %v2235, %v928
    %v2301 = vsel %vm2262, %v2236, %v930
    %v2302 = vsel %vm2262, %v2237, %v932
    %v2303 = vsel %vm2262, %v2238, %v934
    %v2304 = vsel %vm2262, %v2239, %v936
    %v2305 = vsel %vm2262, %v2240, %v938
    %v2306 = vsel %vm2262, %v2241, %v940
    %v2307 = vsel %vm2262, %v2242, %v942
    %v2308 = vsel %vm2262, %v2243, %v944
    %v2309 = vsel %vm2262, %v2244, %v946
    %v2310 = vsel %vm2262, %v2245, %v948
    %v2311 = vsel %vm2262, %v2246, %v950
    %v2312 = vsel %vm2262, %v2247, %v952
    %v2313 = vsel %vm2262, %v2248, %v954
    %v2314 = vsel %vm2262, %v2249, %v956
    %v2315 = vsel %vm2262, %v2250, %v958
    %v2316 = vsel %vm2262, %v2251, %v960
    %v2317 = vsel %vm2262, %v2252, %v962
    %v2318 = vsel %vm2262, %v2253, %v964
    %v2319 = vsel %vm2262, %v2254, %v966
    %v2320 = vsel %vm2262, %v2255, %v968
    %v2321 = vsel %vm2262, %v2256, %v970
    %v2322 = vsel %vm2262, %v2257, %v972
    %v2323 = vsel %vm2262, %v2258, %v974
    %v2324 = vsel %vm2262, %v2259, %v976
    %v2325 = vsel %vm2262, %v2260, %v978
    %v2326 = vsel %vm2262, %v2261, %v980
    %vm2327 = vcmask 97280
    %v2328 = vsel %vm2327, %v2263, %v1046
    %v2329 = vsel %vm2327, %v2264, %v1048
    %v2330 = vsel %vm2327, %v2265, %v1050
    %v2331 = vsel %vm2327, %v2266, %v1052
    %v2332 = vsel %vm2327, %v2267, %v1054
    %v2333 = vsel %vm2327, %v2268, %v1056
    %v2334 = vsel %vm2327, %v2269, %v1058
    %v2335 = vsel %vm2327, %v2270, %v1060
    %v2336 = vsel %vm2327, %v2271, %v1062
    %v2337 = vsel %vm2327, %v2272, %v1064
    %v2338 = vsel %vm2327, %v2273, %v1066
    %v2339 = vsel %vm2327, %v2274, %v1068
    %v2340 = vsel %vm2327, %v2275, %v1070
    %v2341 = vsel %vm2327, %v2276, %v1072
    %v2342 = vsel %vm2327, %v2277, %v1074
    %v2343 = vsel %vm2327, %v2278, %v1076
    %v2344 = vsel %vm2327, %v2279, %v1078
    %v2345 = vsel %vm2327, %v2280, %v1080
    %v2346 = vsel %vm2327, %v2281, %v1082
    %v2347 = vsel %vm2327, %v2282, %v1084
    %v2348 = vsel %vm2327, %v2283, %v1086
    %v2349 = vsel %vm2327, %v2284, %v1088
    %v2350 = vsel %vm2327, %v2285, %v1090
    %v2351 = vsel %vm2327, %v2286, %v1092
    %v2352 = vsel %vm2327, %v2287, %v1094
    %v2353 = vsel %vm2327, %v2288, %v1096
    %v2354 = vsel %vm2327, %v2289, %v1098
    %v2355 = vsel %vm2327, %v2290, %v1100
    %v2356 = vsel %vm2327, %v2291, %v1102
    %v2357 = vsel %vm2327, %v2292, %v1104
    %v2358 = vsel %vm2327, %v2293, %v1106
    %v2359 = vsel %vm2327, %v2294, %v1108
    %v2360 = vsel %vm2327, %v2295, %v1110
    %v2361 = vsel %vm2327, %v2296, %v1112
    %v2362 = vsel %vm2327, %v2297, %v1114
    %v2363 = vsel %vm2327, %v2298, %v1116
    %v2364 = vsel %vm2327, %v2299, %v1118
    %v2365 = vsel %vm2327, %v2300, %v1120
    %v2366 = vsel %vm2327, %v2301, %v1122
    %v2367 = vsel %vm2327, %v2302, %v1124
    %v2368 = vsel %vm2327, %v2303, %v1126
    %v2369 = vsel %vm2327, %v2304, %v1128
    %v2370 = vsel %vm2327, %v2305, %v1130
    %v2371 = vsel %vm2327, %v2306, %v1132
    %v2372 = vsel %vm2327, %v2307, %v1134
    %v2373 = vsel %vm2327, %v2308, %v1136
    %v2374 = vsel %vm2327, %v2309, %v1138
    %v2375 = vsel %vm2327, %v2310, %v1140
    %v2376 = vsel %vm2327, %v2311, %v1142
    %v2377 = vsel %vm2327, %v2312, %v1144
    %v2378 = vsel %vm2327, %v2313, %v1146
    %v2379 = vsel %vm2327, %v2314, %v1148
    %v2380 = vsel %vm2327, %v2315, %v1150
    %v2381 = vsel %vm2327, %v2316, %v1152
    %v2382 = vsel %vm2327, %v2317, %v1154
    %v2383 = vsel %vm2327, %v2318, %v1156
    %v2384 = vsel %vm2327, %v2319, %v1158
    %v2385 = vsel %vm2327, %v2320, %v1160
    %v2386 = vsel %vm2327, %v2321, %v1162
    %v2387 = vsel %vm2327, %v2322, %v1164
    %v2388 = vsel %vm2327, %v2323, %v1166
    %v2389 = vsel %vm2327, %v2324, %v1168
    %v2390 = vsel %vm2327, %v2325, %v1170
    %v2391 = vsel %vm2327, %v2326, %v1172
    %vm2392 = vcmask 130048
    %v2393 = vsel %vm2392, %v2328, %v1238
    %v2394 = vsel %vm2392, %v2329, %v1240
    %v2395 = vsel %vm2392, %v2330, %v1242
    %v2396 = vsel %vm2392, %v2331, %v1244
    %v2397 = vsel %vm2392, %v2332, %v1246
    %v2398 = vsel %vm2392, %v2333, %v1248
    %v2399 = vsel %vm2392, %v2334, %v1250
    %v2400 = vsel %vm2392, %v2335, %v1252
    %v2401 = vsel %vm2392, %v2336, %v1254
    %v2402 = vsel %vm2392, %v2337, %v1256
    %v2403 = vsel %vm2392, %v2338, %v1258
    %v2404 = vsel %vm2392, %v2339, %v1260
    %v2405 = vsel %vm2392, %v2340, %v1262
    %v2406 = vsel %vm2392, %v2341, %v1264
    %v2407 = vsel %vm2392, %v2342, %v1266
    %v2408 = vsel %vm2392, %v2343, %v1268
    %v2409 = vsel %vm2392, %v2344, %v1270
    %v2410 = vsel %vm2392, %v2345, %v1272
    %v2411 = vsel %vm2392, %v2346, %v1274
    %v2412 = vsel %vm2392, %v2347, %v1276
    %v2413 = vsel %vm2392, %v2348, %v1278
    %v2414 = vsel %vm2392, %v2349, %v1280
    %v2415 = vsel %vm2392, %v2350, %v1282
    %v2416 = vsel %vm2392, %v2351, %v1284
    %v2417 = vsel %vm2392, %v2352, %v1286
    %v2418 = vsel %vm2392, %v2353, %v1288
    %v2419 = vsel %vm2392, %v2354, %v1290
    %v2420 = vsel %vm2392, %v2355, %v1292
    %v2421 = vsel %vm2392, %v2356, %v1294
    %v2422 = vsel %vm2392, %v2357, %v1296
    %v2423 = vsel %vm2392, %v2358, %v1298
    %v2424 = vsel %vm2392, %v2359, %v1300
    %v2425 = vsel %vm2392, %v2360, %v1302
    %v2426 = vsel %vm2392, %v2361, %v1304
    %v2427 = vsel %vm2392, %v2362, %v1306
    %v2428 = vsel %vm2392, %v2363, %v1308
    %v2429 = vsel %vm2392, %v2364, %v1310
    %v2430 = vsel %vm2392, %v2365, %v1312
    %v2431 = vsel %vm2392, %v2366, %v1314
    %v2432 = vsel %vm2392, %v2367, %v1316
    %v2433 = vsel %vm2392, %v2368, %v1318
    %v2434 = vsel %vm2392, %v2369, %v1320
    %v2435 = vsel %vm2392, %v2370, %v1322
    %v2436 = vsel %vm2392, %v2371, %v1324
    %v2437 = vsel %vm2392, %v2372, %v1326
    %v2438 = vsel %vm2392, %v2373, %v1328
    %v2439 = vsel %vm2392, %v2374, %v1330
    %v2440 = vsel %vm2392, %v2375, %v1332
    %v2441 = vsel %vm2392, %v2376, %v1334
    %v2442 = vsel %vm2392, %v2377, %v1336
    %v2443 = vsel %vm2392, %v2378, %v1338
    %v2444 = vsel %vm2392, %v2379, %v1340
    %v2445 = vsel %vm2392, %v2380, %v1342
    %v2446 = vsel %vm2392, %v2381, %v1344
    %v2447 = vsel %vm2392, %v2382, %v1346
    %v2448 = vsel %vm2392, %v2383, %v1348
    %v2449 = vsel %vm2392, %v2384, %v1350
    %v2450 = vsel %vm2392, %v2385, %v1352
    %v2451 = vsel %vm2392, %v2386, %v1354
    %v2452 = vsel %vm2392, %v2387, %v1356
    %v2453 = vsel %vm2392, %v2388, %v1358
    %v2454 = vsel %vm2392, %v2389, %v1360
    %v2455 = vsel %vm2392, %v2390, %v1362
    %v2456 = vsel %vm2392, %v2391, %v1364
    %vm2457 = vcmask 162816
    %v2458 = vsel %vm2457, %v2393, %v1430
    %v2459 = vsel %vm2457, %v2394, %v1432
    %v2460 = vsel %vm2457, %v2395, %v1434
    %v2461 = vsel %vm2457, %v2396, %v1436
    %v2462 = vsel %vm2457, %v2397, %v1438
    %v2463 = vsel %vm2457, %v2398, %v1440
    %v2464 = vsel %vm2457, %v2399, %v1442
    %v2465 = vsel %vm2457, %v2400, %v1444
    %v2466 = vsel %vm2457, %v2401, %v1446
    %v2467 = vsel %vm2457, %v2402, %v1448
    %v2468 = vsel %vm2457, %v2403, %v1450
    %v2469 = vsel %vm2457, %v2404, %v1452
    %v2470 = vsel %vm2457, %v2405, %v1454
    %v2471 = vsel %vm2457, %v2406, %v1456
    %v2472 = vsel %vm2457, %v2407, %v1458
    %v2473 = vsel %vm2457, %v2408, %v1460
    %v2474 = vsel %vm2457, %v2409, %v1462
    %v2475 = vsel %vm2457, %v2410, %v1464
    %v2476 = vsel %vm2457, %v2411, %v1466
    %v2477 = vsel %vm2457, %v2412, %v1468
    %v2478 = vsel %vm2457, %v2413, %v1470
    %v2479 = vsel %vm2457, %v2414, %v1472
    %v2480 = vsel %vm2457, %v2415, %v1474
    %v2481 = vsel %vm2457, %v2416, %v1476
    %v2482 = vsel %vm2457, %v2417, %v1478
    %v2483 = vsel %vm2457, %v2418, %v1480
    %v2484 = vsel %vm2457, %v2419, %v1482
    %v2485 = vsel %vm2457, %v2420, %v1484
    %v2486 = vsel %vm2457, %v2421, %v1486
    %v2487 = vsel %vm2457, %v2422, %v1488
    %v2488 = vsel %vm2457, %v2423, %v1490
    %v2489 = vsel %vm2457, %v2424, %v1492
    %v2490 = vsel %vm2457, %v2425, %v1494
    %v2491 = vsel %vm2457, %v2426, %v1496
    %v2492 = vsel %vm2457, %v2427, %v1498
    %v2493 = vsel %vm2457, %v2428, %v1500
    %v2494 = vsel %vm2457, %v2429, %v1502
    %v2495 = vsel %vm2457, %v2430, %v1504
    %v2496 = vsel %vm2457, %v2431, %v1506
    %v2497 = vsel %vm2457, %v2432, %v1508
    %v2498 = vsel %vm2457, %v2433, %v1510
    %v2499 = vsel %vm2457, %v2434, %v1512
    %v2500 = vsel %vm2457, %v2435, %v1514
    %v2501 = vsel %vm2457, %v2436, %v1516
    %v2502 = vsel %vm2457, %v2437, %v1518
    %v2503 = vsel %vm2457, %v2438, %v1520
    %v2504 = vsel %vm2457, %v2439, %v1522
    %v2505 = vsel %vm2457, %v2440, %v1524
    %v2506 = vsel %vm2457, %v2441, %v1526
    %v2507 = vsel %vm2457, %v2442, %v1528
    %v2508 = vsel %vm2457, %v2443, %v1530
    %v2509 = vsel %vm2457, %v2444, %v1532
    %v2510 = vsel %vm2457, %v2445, %v1534
    %v2511 = vsel %vm2457, %v2446, %v1536
    %v2512 = vsel %vm2457, %v2447, %v1538
    %v2513 = vsel %vm2457, %v2448, %v1540
    %v2514 = vsel %vm2457, %v2449, %v1542
    %v2515 = vsel %vm2457, %v2450, %v1544
    %v2516 = vsel %vm2457, %v2451, %v1546
    %v2517 = vsel %vm2457, %v2452, %v1548
    %v2518 = vsel %vm2457, %v2453, %v1550
    %v2519 = vsel %vm2457, %v2454, %v1552
    %v2520 = vsel %vm2457, %v2455, %v1554
    %v2521 = vsel %vm2457, %v2456, %v1556
    %vm2522 = vcmask 195584
    %v2523 = vsel %vm2522, %v2458, %v1622
    %v2524 = vsel %vm2522, %v2459, %v1624
    %v2525 = vsel %vm2522, %v2460, %v1626
    %v2526 = vsel %vm2522, %v2461, %v1628
    %v2527 = vsel %vm2522, %v2462, %v1630
    %v2528 = vsel %vm2522, %v2463, %v1632
    %v2529 = vsel %vm2522, %v2464, %v1634
    %v2530 = vsel %vm2522, %v2465, %v1636
    %v2531 = vsel %vm2522, %v2466, %v1638
    %v2532 = vsel %vm2522, %v2467, %v1640
    %v2533 = vsel %vm2522, %v2468, %v1642
    %v2534 = vsel %vm2522, %v2469, %v1644
    %v2535 = vsel %vm2522, %v2470, %v1646
    %v2536 = vsel %vm2522, %v2471, %v1648
    %v2537 = vsel %vm2522, %v2472, %v1650
    %v2538 = vsel %vm2522, %v2473, %v1652
    %v2539 = vsel %vm2522, %v2474, %v1654
    %v2540 = vsel %vm2522, %v2475, %v1656
    %v2541 = vsel %vm2522, %v2476, %v1658
    %v2542 = vsel %vm2522, %v2477, %v1660
    %v2543 = vsel %vm2522, %v2478, %v1662
    %v2544 = vsel %vm2522, %v2479, %v1664
    %v2545 = vsel %vm2522, %v2480, %v1666
    %v2546 = vsel %vm2522, %v2481, %v1668
    %v2547 = vsel %vm2522, %v2482, %v1670
    %v2548 = vsel %vm2522, %v2483, %v1672
    %v2549 = vsel %vm2522, %v2484, %v1674
    %v2550 = vsel %vm2522, %v2485, %v1676
    %v2551 = vsel %vm2522, %v2486, %v1678
    %v2552 = vsel %vm2522, %v2487, %v1680
    %v2553 = vsel %vm2522, %v2488, %v1682
    %v2554 = vsel %vm2522, %v2489, %v1684
    %v2555 = vsel %vm2522, %v2490, %v1686
    %v2556 = vsel %vm2522, %v2491, %v1688
    %v2557 = vsel %vm2522, %v2492, %v1690
    %v2558 = vsel %vm2522, %v2493, %v1692
    %v2559 = vsel %vm2522, %v2494, %v1694
    %v2560 = vsel %vm2522, %v2495, %v1696
    %v2561 = vsel %vm2522, %v2496, %v1698
    %v2562 = vsel %vm2522, %v2497, %v1700
    %v2563 = vsel %vm2522, %v2498, %v1702
    %v2564 = vsel %vm2522, %v2499, %v1704
    %v2565 = vsel %vm2522, %v2500, %v1706
    %v2566 = vsel %vm2522, %v2501, %v1708
    %v2567 = vsel %vm2522, %v2502, %v1710
    %v2568 = vsel %vm2522, %v2503, %v1712
    %v2569 = vsel %vm2522, %v2504, %v1714
    %v2570 = vsel %vm2522, %v2505, %v1716
    %v2571 = vsel %vm2522, %v2506, %v1718
    %v2572 = vsel %vm2522, %v2507, %v1720
    %v2573 = vsel %vm2522, %v2508, %v1722
    %v2574 = vsel %vm2522, %v2509, %v1724
    %v2575 = vsel %vm2522, %v2510, %v1726
    %v2576 = vsel %vm2522, %v2511, %v1728
    %v2577 = vsel %vm2522, %v2512, %v1730
    %v2578 = vsel %vm2522, %v2513, %v1732
    %v2579 = vsel %vm2522, %v2514, %v1734
    %v2580 = vsel %vm2522, %v2515, %v1736
    %v2581 = vsel %vm2522, %v2516, %v1738
    %v2582 = vsel %vm2522, %v2517, %v1740
    %v2583 = vsel %vm2522, %v2518, %v1742
    %v2584 = vsel %vm2522, %v2519, %v1744
    %v2585 = vsel %vm2522, %v2520, %v1746
    %v2586 = vsel %vm2522, %v2521, %v1748
    %vm2587 = vcmask 228352
    %v2588 = vsel %vm2587, %v2523, %v1814
    %v2589 = vsel %vm2587, %v2524, %v1816
    %v2590 = vsel %vm2587, %v2525, %v1818
    %v2591 = vsel %vm2587, %v2526, %v1820
    %v2592 = vsel %vm2587, %v2527, %v1822
    %v2593 = vsel %vm2587, %v2528, %v1824
    %v2594 = vsel %vm2587, %v2529, %v1826
    %v2595 = vsel %vm2587, %v2530, %v1828
    %v2596 = vsel %vm2587, %v2531, %v1830
    %v2597 = vsel %vm2587, %v2532, %v1832
    %v2598 = vsel %vm2587, %v2533, %v1834
    %v2599 = vsel %vm2587, %v2534, %v1836
    %v2600 = vsel %vm2587, %v2535, %v1838
    %v2601 = vsel %vm2587, %v2536, %v1840
    %v2602 = vsel %vm2587, %v2537, %v1842
    %v2603 = vsel %vm2587, %v2538, %v1844
    %v2604 = vsel %vm2587, %v2539, %v1846
    %v2605 = vsel %vm2587, %v2540, %v1848
    %v2606 = vsel %vm2587, %v2541, %v1850
    %v2607 = vsel %vm2587, %v2542, %v1852
    %v2608 = vsel %vm2587, %v2543, %v1854
    %v2609 = vsel %vm2587, %v2544, %v1856
    %v2610 = vsel %vm2587, %v2545, %v1858
    %v2611 = vsel %vm2587, %v2546, %v1860
    %v2612 = vsel %vm2587, %v2547, %v1862
    %v2613 = vsel %vm2587, %v2548, %v1864
    %v2614 = vsel %vm2587, %v2549, %v1866
    %v2615 = vsel %vm2587, %v2550, %v1868
    %v2616 = vsel %vm2587, %v2551, %v1870
    %v2617 = vsel %vm2587, %v2552, %v1872
    %v2618 = vsel %vm2587, %v2553, %v1874
    %v2619 = vsel %vm2587, %v2554, %v1876
    %v2620 = vsel %vm2587, %v2555, %v1878
    %v2621 = vsel %vm2587, %v2556, %v1880
    %v2622 = vsel %vm2587, %v2557, %v1882
    %v2623 = vsel %vm2587, %v2558, %v1884
    %v2624 = vsel %vm2587, %v2559, %v1886
    %v2625 = vsel %vm2587, %v2560, %v1888
    %v2626 = vsel %vm2587, %v2561, %v1890
    %v2627 = vsel %vm2587, %v2562, %v1892
    %v2628 = vsel %vm2587, %v2563, %v1894
    %v2629 = vsel %vm2587, %v2564, %v1896
    %v2630 = vsel %vm2587, %v2565, %v1898
    %v2631 = vsel %vm2587, %v2566, %v1900
    %v2632 = vsel %vm2587, %v2567, %v1902
    %v2633 = vsel %vm2587, %v2568, %v1904
    %v2634 = vsel %vm2587, %v2569, %v1906
    %v2635 = vsel %vm2587, %v2570, %v1908
    %v2636 = vsel %vm2587, %v2571, %v1910
    %v2637 = vsel %vm2587, %v2572, %v1912
    %v2638 = vsel %vm2587, %v2573, %v1914
    %v2639 = vsel %vm2587, %v2574, %v1916
    %v2640 = vsel %vm2587, %v2575, %v1918
    %v2641 = vsel %vm2587, %v2576, %v1920
    %v2642 = vsel %vm2587, %v2577, %v1922
    %v2643 = vsel %vm2587, %v2578, %v1924
    %v2644 = vsel %vm2587, %v2579, %v1926
    %v2645 = vsel %vm2587, %v2580, %v1928
    %v2646 = vsel %vm2587, %v2581, %v1930
    %v2647 = vsel %vm2587, %v2582, %v1932
    %v2648 = vsel %vm2587, %v2583, %v1934
    %v2649 = vsel %vm2587, %v2584, %v1936
    %v2650 = vsel %vm2587, %v2585, %v1938
    %v2651 = vsel %vm2587, %v2586, %v1940
    %vm2652 = vcmask 261120
    %v2653 = vsel %vm2652, %v2588, %v2006
    %v2654 = vsel %vm2652, %v2589, %v2008
    %v2655 = vsel %vm2652, %v2590, %v2010
    %v2656 = vsel %vm2652, %v2591, %v2012
    %v2657 = vsel %vm2652, %v2592, %v2014
    %v2658 = vsel %vm2652, %v2593, %v2016
    %v2659 = vsel %vm2652, %v2594, %v2018
    %v2660 = vsel %vm2652, %v2595, %v2020
    %v2661 = vsel %vm2652, %v2596, %v2022
    %v2662 = vsel %vm2652, %v2597, %v2024
    %v2663 = vsel %vm2652, %v2598, %v2026
    %v2664 = vsel %vm2652, %v2599, %v2028
    %v2665 = vsel %vm2652, %v2600, %v2030
    %v2666 = vsel %vm2652, %v2601, %v2032
    %v2667 = vsel %vm2652, %v2602, %v2034
    %v2668 = vsel %vm2652, %v2603, %v2036
    %v2669 = vsel %vm2652, %v2604, %v2038
    %v2670 = vsel %vm2652, %v2605, %v2040
    %v2671 = vsel %vm2652, %v2606, %v2042
    %v2672 = vsel %vm2652, %v2607, %v2044
    %v2673 = vsel %vm2652, %v2608, %v2046
    %v2674 = vsel %vm2652, %v2609, %v2048
    %v2675 = vsel %vm2652, %v2610, %v2050
    %v2676 = vsel %vm2652, %v2611, %v2052
    %v2677 = vsel %vm2652, %v2612, %v2054
    %v2678 = vsel %vm2652, %v2613, %v2056
    %v2679 = vsel %vm2652, %v2614, %v2058
    %v2680 = vsel %vm2652, %v2615, %v2060
    %v2681 = vsel %vm2652, %v2616, %v2062
    %v2682 = vsel %vm2652, %v2617, %v2064
    %v2683 = vsel %vm2652, %v2618, %v2066
    %v2684 = vsel %vm2652, %v2619, %v2068
    %v2685 = vsel %vm2652, %v2620, %v2070
    %v2686 = vsel %vm2652, %v2621, %v2072
    %v2687 = vsel %vm2652, %v2622, %v2074
    %v2688 = vsel %vm2652, %v2623, %v2076
    %v2689 = vsel %vm2652, %v2624, %v2078
    %v2690 = vsel %vm2652, %v2625, %v2080
    %v2691 = vsel %vm2652, %v2626, %v2082
    %v2692 = vsel %vm2652, %v2627, %v2084
    %v2693 = vsel %vm2652, %v2628, %v2086
    %v2694 = vsel %vm2652, %v2629, %v2088
    %v2695 = vsel %vm2652, %v2630, %v2090
    %v2696 = vsel %vm2652, %v2631, %v2092
    %v2697 = vsel %vm2652, %v2632, %v2094
    %v2698 = vsel %vm2652, %v2633, %v2096
    %v2699 = vsel %vm2652, %v2634, %v2098
    %v2700 = vsel %vm2652, %v2635, %v2100
    %v2701 = vsel %vm2652, %v2636, %v2102
    %v2702 = vsel %vm2652, %v2637, %v2104
    %v2703 = vsel %vm2652, %v2638, %v2106
    %v2704 = vsel %vm2652, %v2639, %v2108
    %v2705 = vsel %vm2652, %v2640, %v2110
    %v2706 = vsel %vm2652, %v2641, %v2112
    %v2707 = vsel %vm2652, %v2642, %v2114
    %v2708 = vsel %vm2652, %v2643, %v2116
    %v2709 = vsel %vm2652, %v2644, %v2118
    %v2710 = vsel %vm2652, %v2645, %v2120
    %v2711 = vsel %vm2652, %v2646, %v2122
    %v2712 = vsel %vm2652, %v2647, %v2124
    %v2713 = vsel %vm2652, %v2648, %v2126
    %v2714 = vsel %vm2652, %v2649, %v2128
    %v2715 = vsel %vm2652, %v2650, %v2130
    %v2716 = vsel %vm2652, %v2651, %v2132
    %v2717 = vld [vmem:[%s1] sm:$0xff]
    %v2718 = vld [vmem:[%s2] sm:$0xff]
    %v2719 = vld [vmem:[%s3] sm:$0xff]
    %2721 = vset.pattern.permute.xlu0 0
    %2722 = vperm.xlu0 %2721, %v2718
    %v2723 = vpop.permute.xlu0 %2722
    %vm2725 = vcmask 293888
    %v2727 = vsel %vm2725, %v2717, 0
    %v2730 = vsel %vm2725, %v2653, 0
    %v2733 = vsel %vm2725, %v2654, 0
    %v2736 = vsel %vm2725, %v2655, 0
    %v2739 = vsel %vm2725, %v2656, 0
    %v2742 = vsel %vm2725, %v2657, 0
    %v2745 = vsel %vm2725, %v2658, 0
    %v2748 = vsel %vm2725, %v2659, 0
    %v2751 = vsel %vm2725, %v2660, 0
    %v2754 = vsel %vm2725, %v2661, 0
    %v2757 = vsel %vm2725, %v2662, 0
    %v2760 = vsel %vm2725, %v2663, 0
    %v2763 = vsel %vm2725, %v2664, 0
    %v2766 = vsel %vm2725, %v2665, 0
    %v2769 = vsel %vm2725, %v2666, 0
    %v2772 = vsel %vm2725, %v2667, 0
    %v2775 = vsel %vm2725, %v2668, 0
    %v2778 = vsel %vm2725, %v2669, 0
    %v2781 = vsel %vm2725, %v2670, 0
    %v2784 = vsel %vm2725, %v2671, 0
    %v2787 = vsel %vm2725, %v2672, 0
    %v2790 = vsel %vm2725, %v2673, 0
    %v2793 = vsel %vm2725, %v2674, 0
    %v2796 = vsel %vm2725, %v2675, 0
    %v2799 = vsel %vm2725, %v2676, 0
    %v2802 = vsel %vm2725, %v2677, 0
    %v2805 = vsel %vm2725, %v2678, 0
    %v2808 = vsel %vm2725, %v2679, 0
    %v2811 = vsel %vm2725, %v2680, 0
    %v2814 = vsel %vm2725, %v2681, 0
    %v2817 = vsel %vm2725, %v2682, 0
    %v2820 = vsel %vm2725, %v2683, 0
    %v2823 = vsel %vm2725, %v2684, 0
    %2825 = vmatprep.subr.mxu0 0.0
    %2826 = vmatpush1.xpose.msra.mxu0 %v2775
    %2827 = vmatprep.subr.mxu0 0.0
    %2828 = vmatpush1.xpose.msra.mxu0 %v2772
    %2829 = vmatprep.subr.mxu0 0.0
    %2830 = vmatpush1.xpose.msra.mxu0 %v2769
    %2831 = vmatprep.subr.mxu0 0.0
    %2832 = vmatpush1.xpose.msra.mxu0 %v2766
    %2833 = vmatprep.subr.mxu0 0.0
    %2834 = vmatpush1.xpose.msra.mxu0 %v2763
    %2835 = vmatprep.subr.mxu0 0.0
    %2836 = vmatpush1.xpose.msra.mxu0 %v2760
    %2837 = vmatprep.subr.mxu0 0.0
    %2838 = vmatpush1.xpose.msra.mxu0 %v2757
    %2839 = vmatprep.subr.mxu0 0.0
    %2840 = vmatpush1.xpose.msra.mxu0 %v2754
    %2841 = vmatprep.subr.mxu0 0.0
    %2842 = vmatpush1.xpose.msra.mxu0 %v2751
    %2843 = vmatprep.subr.mxu0 0.0
    %2844 = vmatpush1.xpose.msra.mxu0 %v2748
    %2845 = vmatprep.subr.mxu0 0.0
    %2846 = vmatpush1.xpose.msra.mxu0 %v2745
    %2847 = vmatprep.subr.mxu0 0.0
    %2848 = vmatpush1.xpose.msra.mxu0 %v2742
    %2849 = vmatprep.subr.mxu0 0.0
    %2850 = vmatpush1.xpose.msra.mxu0 %v2739
    %2851 = vmatprep.subr.mxu0 0.0
    %2852 = vmatpush1.xpose.msra.mxu0 %v2736
    %2853 = vmatprep.subr.mxu0 0.0
    %2854 = vmatpush1.xpose.msra.mxu0 %v2733
    %2855 = vmatprep.subr.mxu0 0.0
    %2856 = vmatpush1.xpose.msra.mxu0 %v2730
    %2857 = vmatprep.subr.mxu0 0.0
    %2858 = vmatpush2.xpose.msra.mxu0 %v2823
    %2859 = vmatprep.subr.mxu0 0.0
    %2860 = vmatpush2.xpose.msra.mxu0 %v2820
    %2861 = vmatprep.subr.mxu0 0.0
    %2862 = vmatpush2.xpose.msra.mxu0 %v2817
    %2863 = vmatprep.subr.mxu0 0.0
    %2864 = vmatpush2.xpose.msra.mxu0 %v2814
    %2865 = vmatprep.subr.mxu0 0.0
    %2866 = vmatpush2.xpose.msra.mxu0 %v2811
    %2867 = vmatprep.subr.mxu0 0.0
    %2868 = vmatpush2.xpose.msra.mxu0 %v2808
    %2869 = vmatprep.subr.mxu0 0.0
    %2870 = vmatpush2.xpose.msra.mxu0 %v2805
    %2871 = vmatprep.subr.mxu0 0.0
    %2872 = vmatpush2.xpose.msra.mxu0 %v2802
    %2873 = vmatprep.subr.mxu0 0.0
    %2874 = vmatpush2.xpose.msra.mxu0 %v2799
    %2875 = vmatprep.subr.mxu0 0.0
    %2876 = vmatpush2.xpose.msra.mxu0 %v2796
    %2877 = vmatprep.subr.mxu0 0.0
    %2878 = vmatpush2.xpose.msra.mxu0 %v2793
    %2879 = vmatprep.subr.mxu0 0.0
    %2880 = vmatpush2.xpose.msra.mxu0 %v2790
    %2881 = vmatprep.subr.mxu0 0.0
    %2882 = vmatpush2.xpose.msra.mxu0 %v2787
    %2883 = vmatprep.subr.mxu0 0.0
    %2884 = vmatpush2.xpose.msra.mxu0 %v2784
    %2885 = vmatprep.subr.mxu0 0.0
    %2886 = vmatpush2.xpose.msra.mxu0 %v2781
    %2887 = vmatprep.subr.mxu0 0.0
    %2888 = vmatpush2.xpose.msra.mxu0 %v2778
    %2889 = vmatprep.mubr.f32.mxu0 0.0
    %2890 = vmatmul.mubr.f32.gmra.mxu0 %v2727
    %v2891 = vpop.f32.mrf.mxu0
    %v2892 = vadd.f32 %v2723, %v2891
    %v2893 = vpop.f32.mrf.mxu0
    %v2894 = vadd.f32 %v2723, %v2893
    %2895 = vdwg.mxu0
    %vm2896 = vcmp.ge.f32.partialorder %v2892, 0.0
    %vm2897 = vcmp.ge.f32.partialorder %v2894, 0.0
    %2899 = vset.pattern.permute.xlu0 0
    %2900 = vperm.xlu0 %2899, %v2719
    %v2901 = vpop.permute.xlu0 %2900
    %v2903 = vmul.f32 %v2901, %v2892
    %v2904 = vmul.f32 %v2901, %v2894
    %v2905 = vsel %vm2896, %v2892, %v2903
    %v2906 = vsel %vm2897, %v2894, %v2904
    %2907 = vst [vmem:[#allocation2] sm:$0xff] %v2905
    %2908 = vst [vmem:[#allocation2 + $0x8] sm:$0xff] %v2906
    %v2910 = vsel %vm2725, %v2685, 0
    %v2913 = vsel %vm2725, %v2686, 0
    %v2916 = vsel %vm2725, %v2687, 0
    %v2919 = vsel %vm2725, %v2688, 0
    %v2922 = vsel %vm2725, %v2689, 0
    %v2925 = vsel %vm2725, %v2690, 0
    %v2928 = vsel %vm2725, %v2691, 0
    %v2931 = vsel %vm2725, %v2692, 0
    %v2934 = vsel %vm2725, %v2693, 0
    %v2937 = vsel %vm2725, %v2694, 0
    %v2940 = vsel %vm2725, %v2695, 0
    %v2943 = vsel %vm2725, %v2696, 0
    %v2946 = vsel %vm2725, %v2697, 0
    %v2949 = vsel %vm2725, %v2698, 0
    %v2952 = vsel %vm2725, %v2699, 0
    %v2955 = vsel %vm2725, %v2700, 0
    %v2958 = vsel %vm2725, %v2701, 0
    %v2961 = vsel %vm2725, %v2702, 0
    %v2964 = vsel %vm2725, %v2703, 0
    %v2967 = vsel %vm2725, %v2704, 0
    %v2970 = vsel %vm2725, %v2705, 0
    %v2973 = vsel %vm2725, %v2706, 0
    %v2976 = vsel %vm2725, %v2707, 0
    %v2979 = vsel %vm2725, %v2708, 0
    %v2982 = vsel %vm2725, %v2709, 0
    %v2985 = vsel %vm2725, %v2710, 0
    %v2988 = vsel %vm2725, %v2711, 0
    %v2991 = vsel %vm2725, %v2712, 0
    %v2994 = vsel %vm2725, %v2713, 0
    %v2997 = vsel %vm2725, %v2714, 0
    %v3000 = vsel %vm2725, %v2715, 0
    %v3003 = vsel %vm2725, %v2716, 0
    %3005 = vmatprep.subr.mxu0 0.0
    %3006 = vmatpush1.xpose.msra.mxu0 %v2955
    %3007 = vmatprep.subr.mxu0 0.0
    %3008 = vmatpush1.xpose.msra.mxu0 %v2952
    %3009 = vmatprep.subr.mxu0 0.0
    %3010 = vmatpush1.xpose.msra.mxu0 %v2949
    %3011 = vmatprep.subr.mxu0 0.0
    %3012 = vmatpush1.xpose.msra.mxu0 %v2946
    %3013 = vmatprep.subr.mxu0 0.0
    %3014 = vmatpush1.xpose.msra.mxu0 %v2943
    %3015 = vmatprep.subr.mxu0 0.0
    %3016 = vmatpush1.xpose.msra.mxu0 %v2940
    %3017 = vmatprep.subr.mxu0 0.0
    %3018 = vmatpush1.xpose.msra.mxu0 %v2937
    %3019 = vmatprep.subr.mxu0 0.0
    %3020 = vmatpush1.xpose.msra.mxu0 %v2934
    %3021 = vmatprep.subr.mxu0 0.0
    %3022 = vmatpush1.xpose.msra.mxu0 %v2931
    %3023 = vmatprep.subr.mxu0 0.0
    %3024 = vmatpush1.xpose.msra.mxu0 %v2928
    %3025 = vmatprep.subr.mxu0 0.0
    %3026 = vmatpush1.xpose.msra.mxu0 %v2925
    %3027 = vmatprep.subr.mxu0 0.0
    %3028 = vmatpush1.xpose.msra.mxu0 %v2922
    %3029 = vmatprep.subr.mxu0 0.0
    %3030 = vmatpush1.xpose.msra.mxu0 %v2919
    %3031 = vmatprep.subr.mxu0 0.0
    %3032 = vmatpush1.xpose.msra.mxu0 %v2916
    %3033 = vmatprep.subr.mxu0 0.0
    %3034 = vmatpush1.xpose.msra.mxu0 %v2913
    %3035 = vmatprep.subr.mxu0 0.0
    %3036 = vmatpush1.xpose.msra.mxu0 %v2910
    %3037 = vmatprep.subr.mxu0 0.0
    %3038 = vmatpush2.xpose.msra.mxu0 %v3003
    %3039 = vmatprep.subr.mxu0 0.0
    %3040 = vmatpush2.xpose.msra.mxu0 %v3000
    %3041 = vmatprep.subr.mxu0 0.0
    %3042 = vmatpush2.xpose.msra.mxu0 %v2997
    %3043 = vmatprep.subr.mxu0 0.0
    %3044 = vmatpush2.xpose.msra.mxu0 %v2994
    %3045 = vmatprep.subr.mxu0 0.0
    %3046 = vmatpush2.xpose.msra.mxu0 %v2991
    %3047 = vmatprep.subr.mxu0 0.0
    %3048 = vmatpush2.xpose.msra.mxu0 %v2988
    %3049 = vmatprep.subr.mxu0 0.0
    %3050 = vmatpush2.xpose.msra.mxu0 %v2985
    %3051 = vmatprep.subr.mxu0 0.0
    %3052 = vmatpush2.xpose.msra.mxu0 %v2982
    %3053 = vmatprep.subr.mxu0 0.0
    %3054 = vmatpush2.xpose.msra.mxu0 %v2979
    %3055 = vmatprep.subr.mxu0 0.0
    %3056 = vmatpush2.xpose.msra.mxu0 %v2976
    %3057 = vmatprep.subr.mxu0 0.0
    %3058 = vmatpush2.xpose.msra.mxu0 %v2973
    %3059 = vmatprep.subr.mxu0 0.0
    %3060 = vmatpush2.xpose.msra.mxu0 %v2970
    %3061 = vmatprep.subr.mxu0 0.0
    %3062 = vmatpush2.xpose.msra.mxu0 %v2967
    %3063 = vmatprep.subr.mxu0 0.0
    %3064 = vmatpush2.xpose.msra.mxu0 %v2964
    %3065 = vmatprep.subr.mxu0 0.0
    %3066 = vmatpush2.xpose.msra.mxu0 %v2961
    %3067 = vmatprep.subr.mxu0 0.0
    %3068 = vmatpush2.xpose.msra.mxu0 %v2958
    %3069 = vmatprep.mubr.f32.mxu0 0.0
    %3070 = vmatmul.mubr.f32.gmra.mxu0 %v2727
    %v3071 = vpop.f32.mrf.mxu0
    %v3072 = vadd.f32 %v2723, %v3071
    %v3073 = vpop.f32.mrf.mxu0
    %v3074 = vadd.f32 %v2723, %v3073
    %3075 = vdwg.mxu0
    %vm3076 = vcmp.ge.f32.partialorder %v3072, 0.0
    %vm3077 = vcmp.ge.f32.partialorder %v3074, 0.0
    %v3078 = vmul.f32 %v2901, %v3072
    %v3079 = vmul.f32 %v2901, %v3074
    %v3080 = vsel %vm3076, %v3072, %v3078
    %v3081 = vsel %vm3077, %v3074, %v3079
    %s3082 = scalar_lea.vmem [#allocation2], 16
    %3083 = vst [vmem:[%s3082] sm:$0xff] %v3080
    %3084 = vst [vmem:[%s3082 + $0x8] sm:$0xff] %v3081
    // Predicated region
    $region18: #{tpu_custom_call.1} parent=1 // pred_check
      _
    $region19: #{tpu_custom_call.1} parent=1 // pred_check_branch
      %3086 = sbr.rel (0) target = $region21
    $region20: #{tpu_custom_call.1} parent=1 // pred_region
      %s3088 = ssub.s32 512, 512
      %3089 = vsyncadd [#allocation3], %s3088
      %s3090 = sshll.u32 [#allocation2], 4
      %s3091 = int_to_ptr.vmem [resolvable:$true] %s3090
      %3096 = dma.vmem_to_hbm [thread:$0]  %s3091, 512, %s4, [#allocation3], 256, 256, 16
    $region21: #{tpu_custom_call.1} parent=1 // pred_fallthru
      _
    // Predicated region
    $region22: #{tpu_custom_call.1} parent=1 // pred_check
      _
    $region23: #{tpu_custom_call.1} parent=1 // pred_check_branch
      %3098 = sbr.rel (0) target = $region25
    $region24: #{tpu_custom_call.1} parent=1 // pred_region
      %3099 = dma.done [#allocation3], 512
    $region25: #{tpu_custom_call.1} parent=1 // pred_fallthru
      _
    %3100 = vsyncpa [#allocation3], 1

</llo_original>
